<compile_context>
chip_gen: v6e
topology: v6e:2x2x1
jax: 0.10.0
libtpu: 0.0.40
codegen_flags: <defaults>
</compile_context>

<pallas_src>
import functools

import jax
import jax.numpy as jnp
from jax.experimental import pallas as pl
from jax.experimental.pallas import tpu as pltpu


WIDTH = 9                        # conv kernel width (odd -> "same" padding)
PAD = (WIDTH - 1) // 2
BN_EPS = 1e-5


# ------------------------------------------------------------------ kernel

def _shift_w(a, d):
    """s[:, p] = a[:, p + d] for in-range p; zeros shifted in at block edges."""
    if d == 0:
        return a
    c, m = a.shape
    if d > 0:
        return jnp.concatenate([a[:, d:], jnp.zeros((c, d), a.dtype)], axis=1)
    return jnp.concatenate([jnp.zeros((c, -d), a.dtype), a[:, : m + d]], axis=1)


def _speech_block_kernel(x_ref, w1_ref, b1_ref, w2_ref, b2_ref, mask_ref, o_ref,
                         *, width):
    """Fused conv1+bn1+relu -> conv2+bn2 -> +x -> relu on one (C, M) block.

    x_ref    : (C, M)              input block, M = rows*W (row-aligned flatten)
    w*_ref   : (width*Cin, Cout,1) BN-folded conv weights
    b*_ref   : (Cout, 1)           BN-folded bias
    mask_ref : (width, 1, M)       0/1 validity mask per tap offset (row bounds)
    o_ref    : (C, M)
    """
    x = x_ref[...].astype(jnp.float32)              # (Cin, M)
    M = x.shape[-1]
    pad = (width - 1) // 2

    def conv_bn(inp, w_ref, b_ref):
        cin = inp.shape[0]
        cout = b_ref.shape[0]
        acc = jnp.zeros((cout, M), jnp.float32) + b_ref[...]   # bias, lane-bcast
        for k in range(width):                       # static, fully unrolled
            d = k - pad
            # shifted[:, p] == inp[:, p + d]; positions whose source falls
            # outside the current W-row are zeroed by the mask.
            xs = _shift_w(inp, d) * mask_ref[k]      # (cin, M) * (1, M)
            for ci in range(cin):
                w_col = w_ref[k * cin + ci]          # (cout, 1) -> lane-bcast
                acc = acc + w_col * xs[ci:ci + 1, :] # VPU FMA, no MXU
        return acc

    h1 = jnp.maximum(conv_bn(x, w1_ref, b1_ref), 0.0)     # stays in VMEM/vregs
    out = conv_bn(h1, w2_ref, b2_ref) + x                  # residual = resident x
    o_ref[...] = jnp.maximum(out, 0.0).astype(o_ref.dtype)


# ---------------------------------------------------------------- wrapper

def _fold_bn(gamma, beta, mean, var):
    scale = gamma / jnp.sqrt(var + BN_EPS)
    bias = beta - mean * scale
    return scale, bias


def _pick_block(h, w, target_elems):
    """Largest row-aligned block (multiple of W, dividing H*W) <= target."""
    rows = 1
    for r in range(1, h + 1):
        if h % r == 0 and r * w <= target_elems:
            rows = r
    return rows * w


def speech_basic_block(x_nchw, params, *, target_block_elems=4096):
    """Forward pass of SpeechBasicBlock (stride=1, downsample=None, eval BN)."""
    N, C, H, W = x_nchw.shape
    w1, w2 = params["w1"], params["w2"]
    width, cin, planes = w1.shape
    # TODO(synk): even widths change the PyTorch output length; not supported.
    assert width % 2 == 1, "only odd conv widths are supported"
    assert cin == C and planes == C and w2.shape == (width, planes, planes), \
        "stride=1 / downsample=None requires inplanes == planes"
    pad = (width - 1) // 2

    # Fold eval-mode BN into the conv weights; kernel only adds bias.
    s1, b1 = _fold_bn(*params["bn1"])
    s2, b2 = _fold_bn(*params["bn2"])
    w1f = (w1 * s1[None, None, :]).reshape(width * C, C, 1).astype(jnp.float32)
    w2f = (w2 * s2[None, None, :]).reshape(width * C, C, 1).astype(jnp.float32)
    b1f = b1.reshape(C, 1).astype(jnp.float32)
    b2f = b2.reshape(C, 1).astype(jnp.float32)

    # Free layout change (no transpose / data movement): NCHW -> (N, C, H*W).
    hw = H * W
    x_flat = x_nchw.reshape(N, C, hw)

    blk = _pick_block(H, W, target_block_elems)      # row-aligned lane block
    # 0/1 masks: for tap offset d = k - pad, output position p (w = p mod W)
    # is valid iff the source column w + d lies inside [0, W) of the same row.
    w_idx = jnp.arange(blk, dtype=jnp.int32) % W
    masks = jnp.stack(
        [((w_idx + (k - pad) >= 0) & (w_idx + (k - pad) < W)) for k in range(width)]
    ).astype(jnp.float32).reshape(width, 1, blk)

    grid = (N, hw // blk)

    x_spec = pl.BlockSpec((None, C, blk), lambda n, j: (n, 0, j))
    w_spec = pl.BlockSpec((width * C, C, 1), lambda n, j: (0, 0, 0))
    b_spec = pl.BlockSpec((C, 1), lambda n, j: (0, 0))
    m_spec = pl.BlockSpec((width, 1, blk), lambda n, j: (0, 0, 0))
    out_spec = pl.BlockSpec((None, C, blk), lambda n, j: (n, 0, j))

    out_flat = pl.pallas_call(
        functools.partial(_speech_block_kernel, width=width),
        out_shape=jax.ShapeDtypeStruct((N, C, hw), x_nchw.dtype),
        grid_spec=pltpu.PrefetchScalarGridSpec(
            num_scalar_prefetch=0,
            grid=grid,
            in_specs=[x_spec, w_spec, b_spec, w_spec, b_spec, m_spec],
            out_specs=out_spec,
        ),
        compiler_params=pltpu.CompilerParams(
            # Both grid axes are independent -> splittable across v7x's 2 TCs.
            # Blocks here are tiny; for real speech shapes raise
            # target_block_elems and set vmem_limit_bytes (keep the
            # double-buffered working set <= ~48 MiB on v7x's 64 MiB VMEM).
            dimension_semantics=("parallel", "parallel"),
        ),
    )(x_flat, w1f, b1f, w2f, b2f, masks)

    return out_flat.reshape(N, C, H, W)


# ------------------------------------------------------------- reference

def _reference_block(x, params):
    """Pure-JAX reference matching the PyTorch forward (eval-mode BN)."""
    def conv(x, w):  # w: (width, cin, cout) -> OIHW (cout, cin, 1, width)
        wt = jnp.transpose(w, (2, 1, 0))[:, :, None, :]
        return jax.lax.conv_general_dilated(
            x, wt, window_strides=(1, 1), padding=((0, 0), (PAD, PAD)),
            dimension_numbers=("NCHW", "OIHW", "NCHW"))

    def bn(x, p):
        g, b, m, v = p
        sh = (1, -1, 1, 1)
        return (x - m.reshape(sh)) / jnp.sqrt(v.reshape(sh) + BN_EPS) \
            * g.reshape(sh) + b.reshape(sh)

    out = jax.nn.relu(bn(conv(x, params["w1"]), params["bn1"]))
    out = bn(conv(out, params["w2"]), params["bn2"]) + x
    return jax.nn.relu(out)


# ------------------------------------------------------------------- main

if __name__ == "__main__":
    key = jax.random.PRNGKey(0)
    k_x, k_w1, k_w2, k_g1, k_b1, k_g2, k_b2, k_m1, k_m2 = jax.random.split(key, 9)

    N, C, H, W = 2, 4, 16, 16            # inplanes == planes == 4
    inplanes = planes = C

    x = jax.random.normal(k_x, (N, C, H, W), jnp.float32)

    params = {
        # conv weights stored as (width, Cin, Cout)
        "w1": 0.1 * jax.random.normal(k_w1, (WIDTH, inplanes, planes), jnp.float32),
        "w2": 0.1 * jax.random.normal(k_w2, (WIDTH, planes, planes), jnp.float32),
        # BN params: (gamma, beta, running_mean, running_var)
        "bn1": (1.0 + 0.1 * jax.random.normal(k_g1, (planes,), jnp.float32),
                0.1 * jax.random.normal(k_b1, (planes,), jnp.float32),
                0.1 * jax.random.normal(k_m1, (planes,), jnp.float32),
                jnp.abs(1.0 + 0.1 * jax.random.normal(k_m2, (planes,), jnp.float32))),
        "bn2": (1.0 + 0.1 * jax.random.normal(k_g2, (planes,), jnp.float32),
                0.1 * jax.random.normal(k_b2, (planes,), jnp.float32),
                jnp.zeros((planes,), jnp.float32),
                jnp.ones((planes,), jnp.float32)),
    }

    y = jax.jit(speech_basic_block)(x, params)
    y = jax.block_until_ready(y)

    y_ref = _reference_block(x, params)
    assert y.shape == (N, planes, H, W)
    assert jnp.allclose(y, y_ref, atol=1e-4, rtol=1e-4), "mismatch vs reference"

    print("KERNEL_OK")
</pallas_src>

<mosaic_0001>
module attributes {stable_mosaic.version = 11 : i64} {
  func.func @_speech_block_kernel(%arg0: i32, %arg1: i32, %arg2: memref<1x4x256xf32, #tpu.memory_space<vmem>>, %arg3: memref<36x4x1xf32, #tpu.memory_space<vmem>>, %arg4: memref<4x1xf32, #tpu.memory_space<vmem>>, %arg5: memref<36x4x1xf32, #tpu.memory_space<vmem>>, %arg6: memref<4x1xf32, #tpu.memory_space<vmem>>, %arg7: memref<9x1x256xf32, #tpu.memory_space<vmem>>, %arg8: memref<1x4x256xf32, #tpu.memory_space<vmem>>) attributes {dimension_semantics = [#tpu.dimension_semantics<parallel>, #tpu.dimension_semantics<parallel>], iteration_bounds = array<i64: 2, 1>, scalar_prefetch = 0 : i64, scratch_operands = 0 : i64, tpu.core_type = #tpu.core_type<tc>, window_params = [{transform_indices = @transform_0, window_bounds = array<i64: 1, 4, 256>}, {pipeline_mode = #tpu.pipeline_mode<synchronous>, transform_indices = @transform_1, window_bounds = array<i64: 36, 4, 1>}, {pipeline_mode = #tpu.pipeline_mode<synchronous>, transform_indices = @transform_2, window_bounds = array<i64: 4, 1>}, {pipeline_mode = #tpu.pipeline_mode<synchronous>, transform_indices = @transform_3, window_bounds = array<i64: 36, 4, 1>}, {pipeline_mode = #tpu.pipeline_mode<synchronous>, transform_indices = @transform_4, window_bounds = array<i64: 4, 1>}, {pipeline_mode = #tpu.pipeline_mode<synchronous>, transform_indices = @transform_5, window_bounds = array<i64: 9, 1, 256>}, {transform_indices = @transform_6, window_bounds = array<i64: 1, 4, 256>}]} {
    %c0 = arith.constant 0 : index
    %c0_0 = arith.constant 0 : index
    %c0_1 = arith.constant 0 : index
    %0 = vector.load %arg2[%c0, %c0_0, %c0_1] : memref<1x4x256xf32, #tpu.memory_space<vmem>>, vector<1x4x256xf32>
    %1 = vector.shape_cast %0 : vector<1x4x256xf32> to vector<4x256xf32>
    %cst = arith.constant 0.000000e+00 : f32
    %2 = vector.broadcast %cst : f32 to vector<4x256xf32>
    %c0_2 = arith.constant 0 : index
    %c0_3 = arith.constant 0 : index
    %3 = vector.load %arg4[%c0_2, %c0_3] : memref<4x1xf32, #tpu.memory_space<vmem>>, vector<4x1xf32>
    %4 = vector.broadcast %3 : vector<4x1xf32> to vector<4x256xf32>
    %5 = arith.addf %2, %4 : vector<4x256xf32>
    %cst_4 = arith.constant 0.000000e+00 : f32
    %6 = vector.broadcast %cst_4 : f32 to vector<4x4xf32>
    %7 = vector.extract_strided_slice %1 {offsets = [0, 0], sizes = [4, 252], strides = [1, 1]} : vector<4x256xf32> to vector<4x252xf32>
    %8 = tpu.concatenate %6, %7 in 1 : vector<4x4xf32>, vector<4x252xf32> -> vector<4x256xf32>
    %c0_5 = arith.constant 0 : index
    %c0_6 = arith.constant 0 : index
    %c0_7 = arith.constant 0 : index
    %9 = vector.load %arg7[%c0_5, %c0_6, %c0_7] : memref<9x1x256xf32, #tpu.memory_space<vmem>>, vector<1x1x256xf32>
    %10 = vector.shape_cast %9 : vector<1x1x256xf32> to vector<1x256xf32>
    %11 = vector.broadcast %10 : vector<1x256xf32> to vector<4x256xf32>
    %12 = arith.mulf %8, %11 : vector<4x256xf32>
    %c0_8 = arith.constant 0 : index
    %c0_9 = arith.constant 0 : index
    %c0_10 = arith.constant 0 : index
    %13 = vector.load %arg3[%c0_8, %c0_9, %c0_10] : memref<36x4x1xf32, #tpu.memory_space<vmem>>, vector<1x4x1xf32>
    %14 = vector.shape_cast %13 : vector<1x4x1xf32> to vector<4x1xf32>
    %15 = vector.extract_strided_slice %12 {offsets = [0, 0], sizes = [1, 256], strides = [1, 1]} : vector<4x256xf32> to vector<1x256xf32>
    %16 = vector.broadcast %14 : vector<4x1xf32> to vector<4x256xf32>
    %17 = vector.broadcast %15 : vector<1x256xf32> to vector<4x256xf32>
    %18 = arith.mulf %16, %17 : vector<4x256xf32>
    %19 = arith.addf %5, %18 : vector<4x256xf32>
    %c1 = arith.constant 1 : index
    %c0_11 = arith.constant 0 : index
    %c0_12 = arith.constant 0 : index
    %20 = vector.load %arg3[%c1, %c0_11, %c0_12] : memref<36x4x1xf32, #tpu.memory_space<vmem>>, vector<1x4x1xf32>
    %21 = vector.shape_cast %20 : vector<1x4x1xf32> to vector<4x1xf32>
    %22 = vector.extract_strided_slice %12 {offsets = [1, 0], sizes = [1, 256], strides = [1, 1]} : vector<4x256xf32> to vector<1x256xf32>
    %23 = vector.broadcast %21 : vector<4x1xf32> to vector<4x256xf32>
    %24 = vector.broadcast %22 : vector<1x256xf32> to vector<4x256xf32>
    %25 = arith.mulf %23, %24 : vector<4x256xf32>
    %26 = arith.addf %19, %25 : vector<4x256xf32>
    %c2 = arith.constant 2 : index
    %c0_13 = arith.constant 0 : index
    %c0_14 = arith.constant 0 : index
    %27 = vector.load %arg3[%c2, %c0_13, %c0_14] : memref<36x4x1xf32, #tpu.memory_space<vmem>>, vector<1x4x1xf32>
    %28 = vector.shape_cast %27 : vector<1x4x1xf32> to vector<4x1xf32>
    %29 = vector.extract_strided_slice %12 {offsets = [2, 0], sizes = [1, 256], strides = [1, 1]} : vector<4x256xf32> to vector<1x256xf32>
    %30 = vector.broadcast %28 : vector<4x1xf32> to vector<4x256xf32>
    %31 = vector.broadcast %29 : vector<1x256xf32> to vector<4x256xf32>
    %32 = arith.mulf %30, %31 : vector<4x256xf32>
    %33 = arith.addf %26, %32 : vector<4x256xf32>
    %c3 = arith.constant 3 : index
    %c0_15 = arith.constant 0 : index
    %c0_16 = arith.constant 0 : index
    %34 = vector.load %arg3[%c3, %c0_15, %c0_16] : memref<36x4x1xf32, #tpu.memory_space<vmem>>, vector<1x4x1xf32>
    %35 = vector.shape_cast %34 : vector<1x4x1xf32> to vector<4x1xf32>
    %36 = vector.extract_strided_slice %12 {offsets = [3, 0], sizes = [1, 256], strides = [1, 1]} : vector<4x256xf32> to vector<1x256xf32>
    %37 = vector.broadcast %35 : vector<4x1xf32> to vector<4x256xf32>
    %38 = vector.broadcast %36 : vector<1x256xf32> to vector<4x256xf32>
    %39 = arith.mulf %37, %38 : vector<4x256xf32>
    %40 = arith.addf %33, %39 : vector<4x256xf32>
    %cst_17 = arith.constant 0.000000e+00 : f32
    %41 = vector.broadcast %cst_17 : f32 to vector<4x3xf32>
    %42 = vector.extract_strided_slice %1 {offsets = [0, 0], sizes = [4, 253], strides = [1, 1]} : vector<4x256xf32> to vector<4x253xf32>
    %43 = tpu.concatenate %41, %42 in 1 : vector<4x3xf32>, vector<4x253xf32> -> vector<4x256xf32>
    %c1_18 = arith.constant 1 : index
    %c0_19 = arith.constant 0 : index
    %c0_20 = arith.constant 0 : index
    %44 = vector.load %arg7[%c1_18, %c0_19, %c0_20] : memref<9x1x256xf32, #tpu.memory_space<vmem>>, vector<1x1x256xf32>
    %45 = vector.shape_cast %44 : vector<1x1x256xf32> to vector<1x256xf32>
    %46 = vector.broadcast %45 : vector<1x256xf32> to vector<4x256xf32>
    %47 = arith.mulf %43, %46 : vector<4x256xf32>
    %c4 = arith.constant 4 : index
    %c0_21 = arith.constant 0 : index
    %c0_22 = arith.constant 0 : index
    %48 = vector.load %arg3[%c4, %c0_21, %c0_22] : memref<36x4x1xf32, #tpu.memory_space<vmem>>, vector<1x4x1xf32>
    %49 = vector.shape_cast %48 : vector<1x4x1xf32> to vector<4x1xf32>
    %50 = vector.extract_strided_slice %47 {offsets = [0, 0], sizes = [1, 256], strides = [1, 1]} : vector<4x256xf32> to vector<1x256xf32>
    %51 = vector.broadcast %49 : vector<4x1xf32> to vector<4x256xf32>
    %52 = vector.broadcast %50 : vector<1x256xf32> to vector<4x256xf32>
    %53 = arith.mulf %51, %52 : vector<4x256xf32>
    %54 = arith.addf %40, %53 : vector<4x256xf32>
    %c5 = arith.constant 5 : index
    %c0_23 = arith.constant 0 : index
    %c0_24 = arith.constant 0 : index
    %55 = vector.load %arg3[%c5, %c0_23, %c0_24] : memref<36x4x1xf32, #tpu.memory_space<vmem>>, vector<1x4x1xf32>
    %56 = vector.shape_cast %55 : vector<1x4x1xf32> to vector<4x1xf32>
    %57 = vector.extract_strided_slice %47 {offsets = [1, 0], sizes = [1, 256], strides = [1, 1]} : vector<4x256xf32> to vector<1x256xf32>
    %58 = vector.broadcast %56 : vector<4x1xf32> to vector<4x256xf32>
    %59 = vector.broadcast %57 : vector<1x256xf32> to vector<4x256xf32>
    %60 = arith.mulf %58, %59 : vector<4x256xf32>
    %61 = arith.addf %54, %60 : vector<4x256xf32>
    %c6 = arith.constant 6 : index
    %c0_25 = arith.constant 0 : index
    %c0_26 = arith.constant 0 : index
    %62 = vector.load %arg3[%c6, %c0_25, %c0_26] : memref<36x4x1xf32, #tpu.memory_space<vmem>>, vector<1x4x1xf32>
    %63 = vector.shape_cast %62 : vector<1x4x1xf32> to vector<4x1xf32>
    %64 = vector.extract_strided_slice %47 {offsets = [2, 0], sizes = [1, 256], strides = [1, 1]} : vector<4x256xf32> to vector<1x256xf32>
    %65 = vector.broadcast %63 : vector<4x1xf32> to vector<4x256xf32>
    %66 = vector.broadcast %64 : vector<1x256xf32> to vector<4x256xf32>
    %67 = arith.mulf %65, %66 : vector<4x256xf32>
    %68 = arith.addf %61, %67 : vector<4x256xf32>
    %c7 = arith.constant 7 : index
    %c0_27 = arith.constant 0 : index
    %c0_28 = arith.constant 0 : index
    %69 = vector.load %arg3[%c7, %c0_27, %c0_28] : memref<36x4x1xf32, #tpu.memory_space<vmem>>, vector<1x4x1xf32>
    %70 = vector.shape_cast %69 : vector<1x4x1xf32> to vector<4x1xf32>
    %71 = vector.extract_strided_slice %47 {offsets = [3, 0], sizes = [1, 256], strides = [1, 1]} : vector<4x256xf32> to vector<1x256xf32>
    %72 = vector.broadcast %70 : vector<4x1xf32> to vector<4x256xf32>
    %73 = vector.broadcast %71 : vector<1x256xf32> to vector<4x256xf32>
    %74 = arith.mulf %72, %73 : vector<4x256xf32>
    %75 = arith.addf %68, %74 : vector<4x256xf32>
    %cst_29 = arith.constant 0.000000e+00 : f32
    %76 = vector.broadcast %cst_29 : f32 to vector<4x2xf32>
    %77 = vector.extract_strided_slice %1 {offsets = [0, 0], sizes = [4, 254], strides = [1, 1]} : vector<4x256xf32> to vector<4x254xf32>
    %78 = tpu.concatenate %76, %77 in 1 : vector<4x2xf32>, vector<4x254xf32> -> vector<4x256xf32>
    %c2_30 = arith.constant 2 : index
    %c0_31 = arith.constant 0 : index
    %c0_32 = arith.constant 0 : index
    %79 = vector.load %arg7[%c2_30, %c0_31, %c0_32] : memref<9x1x256xf32, #tpu.memory_space<vmem>>, vector<1x1x256xf32>
    %80 = vector.shape_cast %79 : vector<1x1x256xf32> to vector<1x256xf32>
    %81 = vector.broadcast %80 : vector<1x256xf32> to vector<4x256xf32>
    %82 = arith.mulf %78, %81 : vector<4x256xf32>
    %c8 = arith.constant 8 : index
    %c0_33 = arith.constant 0 : index
    %c0_34 = arith.constant 0 : index
    %83 = vector.load %arg3[%c8, %c0_33, %c0_34] : memref<36x4x1xf32, #tpu.memory_space<vmem>>, vector<1x4x1xf32>
    %84 = vector.shape_cast %83 : vector<1x4x1xf32> to vector<4x1xf32>
    %85 = vector.extract_strided_slice %82 {offsets = [0, 0], sizes = [1, 256], strides = [1, 1]} : vector<4x256xf32> to vector<1x256xf32>
    %86 = vector.broadcast %84 : vector<4x1xf32> to vector<4x256xf32>
    %87 = vector.broadcast %85 : vector<1x256xf32> to vector<4x256xf32>
    %88 = arith.mulf %86, %87 : vector<4x256xf32>
    %89 = arith.addf %75, %88 : vector<4x256xf32>
    %c9 = arith.constant 9 : index
    %c0_35 = arith.constant 0 : index
    %c0_36 = arith.constant 0 : index
    %90 = vector.load %arg3[%c9, %c0_35, %c0_36] : memref<36x4x1xf32, #tpu.memory_space<vmem>>, vector<1x4x1xf32>
    %91 = vector.shape_cast %90 : vector<1x4x1xf32> to vector<4x1xf32>
    %92 = vector.extract_strided_slice %82 {offsets = [1, 0], sizes = [1, 256], strides = [1, 1]} : vector<4x256xf32> to vector<1x256xf32>
    %93 = vector.broadcast %91 : vector<4x1xf32> to vector<4x256xf32>
    %94 = vector.broadcast %92 : vector<1x256xf32> to vector<4x256xf32>
    %95 = arith.mulf %93, %94 : vector<4x256xf32>
    %96 = arith.addf %89, %95 : vector<4x256xf32>
    %c10 = arith.constant 10 : index
    %c0_37 = arith.constant 0 : index
    %c0_38 = arith.constant 0 : index
    %97 = vector.load %arg3[%c10, %c0_37, %c0_38] : memref<36x4x1xf32, #tpu.memory_space<vmem>>, vector<1x4x1xf32>
    %98 = vector.shape_cast %97 : vector<1x4x1xf32> to vector<4x1xf32>
    %99 = vector.extract_strided_slice %82 {offsets = [2, 0], sizes = [1, 256], strides = [1, 1]} : vector<4x256xf32> to vector<1x256xf32>
    %100 = vector.broadcast %98 : vector<4x1xf32> to vector<4x256xf32>
    %101 = vector.broadcast %99 : vector<1x256xf32> to vector<4x256xf32>
    %102 = arith.mulf %100, %101 : vector<4x256xf32>
    %103 = arith.addf %96, %102 : vector<4x256xf32>
    %c11 = arith.constant 11 : index
    %c0_39 = arith.constant 0 : index
    %c0_40 = arith.constant 0 : index
    %104 = vector.load %arg3[%c11, %c0_39, %c0_40] : memref<36x4x1xf32, #tpu.memory_space<vmem>>, vector<1x4x1xf32>
    %105 = vector.shape_cast %104 : vector<1x4x1xf32> to vector<4x1xf32>
    %106 = vector.extract_strided_slice %82 {offsets = [3, 0], sizes = [1, 256], strides = [1, 1]} : vector<4x256xf32> to vector<1x256xf32>
    %107 = vector.broadcast %105 : vector<4x1xf32> to vector<4x256xf32>
    %108 = vector.broadcast %106 : vector<1x256xf32> to vector<4x256xf32>
    %109 = arith.mulf %107, %108 : vector<4x256xf32>
    %110 = arith.addf %103, %109 : vector<4x256xf32>
    %cst_41 = arith.constant 0.000000e+00 : f32
    %111 = vector.broadcast %cst_41 : f32 to vector<4x1xf32>
    %112 = vector.extract_strided_slice %1 {offsets = [0, 0], sizes = [4, 255], strides = [1, 1]} : vector<4x256xf32> to vector<4x255xf32>
    %113 = tpu.concatenate %111, %112 in 1 : vector<4x1xf32>, vector<4x255xf32> -> vector<4x256xf32>
    %c3_42 = arith.constant 3 : index
    %c0_43 = arith.constant 0 : index
    %c0_44 = arith.constant 0 : index
    %114 = vector.load %arg7[%c3_42, %c0_43, %c0_44] : memref<9x1x256xf32, #tpu.memory_space<vmem>>, vector<1x1x256xf32>
    %115 = vector.shape_cast %114 : vector<1x1x256xf32> to vector<1x256xf32>
    %116 = vector.broadcast %115 : vector<1x256xf32> to vector<4x256xf32>
    %117 = arith.mulf %113, %116 : vector<4x256xf32>
    %c12 = arith.constant 12 : index
    %c0_45 = arith.constant 0 : index
    %c0_46 = arith.constant 0 : index
    %118 = vector.load %arg3[%c12, %c0_45, %c0_46] : memref<36x4x1xf32, #tpu.memory_space<vmem>>, vector<1x4x1xf32>
    %119 = vector.shape_cast %118 : vector<1x4x1xf32> to vector<4x1xf32>
    %120 = vector.extract_strided_slice %117 {offsets = [0, 0], sizes = [1, 256], strides = [1, 1]} : vector<4x256xf32> to vector<1x256xf32>
    %121 = vector.broadcast %119 : vector<4x1xf32> to vector<4x256xf32>
    %122 = vector.broadcast %120 : vector<1x256xf32> to vector<4x256xf32>
    %123 = arith.mulf %121, %122 : vector<4x256xf32>
    %124 = arith.addf %110, %123 : vector<4x256xf32>
    %c13 = arith.constant 13 : index
    %c0_47 = arith.constant 0 : index
    %c0_48 = arith.constant 0 : index
    %125 = vector.load %arg3[%c13, %c0_47, %c0_48] : memref<36x4x1xf32, #tpu.memory_space<vmem>>, vector<1x4x1xf32>
    %126 = vector.shape_cast %125 : vector<1x4x1xf32> to vector<4x1xf32>
    %127 = vector.extract_strided_slice %117 {offsets = [1, 0], sizes = [1, 256], strides = [1, 1]} : vector<4x256xf32> to vector<1x256xf32>
    %128 = vector.broadcast %126 : vector<4x1xf32> to vector<4x256xf32>
    %129 = vector.broadcast %127 : vector<1x256xf32> to vector<4x256xf32>
    %130 = arith.mulf %128, %129 : vector<4x256xf32>
    %131 = arith.addf %124, %130 : vector<4x256xf32>
    %c14 = arith.constant 14 : index
    %c0_49 = arith.constant 0 : index
    %c0_50 = arith.constant 0 : index
    %132 = vector.load %arg3[%c14, %c0_49, %c0_50] : memref<36x4x1xf32, #tpu.memory_space<vmem>>, vector<1x4x1xf32>
    %133 = vector.shape_cast %132 : vector<1x4x1xf32> to vector<4x1xf32>
    %134 = vector.extract_strided_slice %117 {offsets = [2, 0], sizes = [1, 256], strides = [1, 1]} : vector<4x256xf32> to vector<1x256xf32>
    %135 = vector.broadcast %133 : vector<4x1xf32> to vector<4x256xf32>
    %136 = vector.broadcast %134 : vector<1x256xf32> to vector<4x256xf32>
    %137 = arith.mulf %135, %136 : vector<4x256xf32>
    %138 = arith.addf %131, %137 : vector<4x256xf32>
    %c15 = arith.constant 15 : index
    %c0_51 = arith.constant 0 : index
    %c0_52 = arith.constant 0 : index
    %139 = vector.load %arg3[%c15, %c0_51, %c0_52] : memref<36x4x1xf32, #tpu.memory_space<vmem>>, vector<1x4x1xf32>
    %140 = vector.shape_cast %139 : vector<1x4x1xf32> to vector<4x1xf32>
    %141 = vector.extract_strided_slice %117 {offsets = [3, 0], sizes = [1, 256], strides = [1, 1]} : vector<4x256xf32> to vector<1x256xf32>
    %142 = vector.broadcast %140 : vector<4x1xf32> to vector<4x256xf32>
    %143 = vector.broadcast %141 : vector<1x256xf32> to vector<4x256xf32>
    %144 = arith.mulf %142, %143 : vector<4x256xf32>
    %145 = arith.addf %138, %144 : vector<4x256xf32>
    %c4_53 = arith.constant 4 : index
    %c0_54 = arith.constant 0 : index
    %c0_55 = arith.constant 0 : index
    %146 = vector.load %arg7[%c4_53, %c0_54, %c0_55] : memref<9x1x256xf32, #tpu.memory_space<vmem>>, vector<1x1x256xf32>
    %147 = vector.shape_cast %146 : vector<1x1x256xf32> to vector<1x256xf32>
    %148 = vector.broadcast %147 : vector<1x256xf32> to vector<4x256xf32>
    %149 = arith.mulf %1, %148 : vector<4x256xf32>
    %c16 = arith.constant 16 : index
    %c0_56 = arith.constant 0 : index
    %c0_57 = arith.constant 0 : index
    %150 = vector.load %arg3[%c16, %c0_56, %c0_57] : memref<36x4x1xf32, #tpu.memory_space<vmem>>, vector<1x4x1xf32>
    %151 = vector.shape_cast %150 : vector<1x4x1xf32> to vector<4x1xf32>
    %152 = vector.extract_strided_slice %149 {offsets = [0, 0], sizes = [1, 256], strides = [1, 1]} : vector<4x256xf32> to vector<1x256xf32>
    %153 = vector.broadcast %151 : vector<4x1xf32> to vector<4x256xf32>
    %154 = vector.broadcast %152 : vector<1x256xf32> to vector<4x256xf32>
    %155 = arith.mulf %153, %154 : vector<4x256xf32>
    %156 = arith.addf %145, %155 : vector<4x256xf32>
    %c17 = arith.constant 17 : index
    %c0_58 = arith.constant 0 : index
    %c0_59 = arith.constant 0 : index
    %157 = vector.load %arg3[%c17, %c0_58, %c0_59] : memref<36x4x1xf32, #tpu.memory_space<vmem>>, vector<1x4x1xf32>
    %158 = vector.shape_cast %157 : vector<1x4x1xf32> to vector<4x1xf32>
    %159 = vector.extract_strided_slice %149 {offsets = [1, 0], sizes = [1, 256], strides = [1, 1]} : vector<4x256xf32> to vector<1x256xf32>
    %160 = vector.broadcast %158 : vector<4x1xf32> to vector<4x256xf32>
    %161 = vector.broadcast %159 : vector<1x256xf32> to vector<4x256xf32>
    %162 = arith.mulf %160, %161 : vector<4x256xf32>
    %163 = arith.addf %156, %162 : vector<4x256xf32>
    %c18 = arith.constant 18 : index
    %c0_60 = arith.constant 0 : index
    %c0_61 = arith.constant 0 : index
    %164 = vector.load %arg3[%c18, %c0_60, %c0_61] : memref<36x4x1xf32, #tpu.memory_space<vmem>>, vector<1x4x1xf32>
    %165 = vector.shape_cast %164 : vector<1x4x1xf32> to vector<4x1xf32>
    %166 = vector.extract_strided_slice %149 {offsets = [2, 0], sizes = [1, 256], strides = [1, 1]} : vector<4x256xf32> to vector<1x256xf32>
    %167 = vector.broadcast %165 : vector<4x1xf32> to vector<4x256xf32>
    %168 = vector.broadcast %166 : vector<1x256xf32> to vector<4x256xf32>
    %169 = arith.mulf %167, %168 : vector<4x256xf32>
    %170 = arith.addf %163, %169 : vector<4x256xf32>
    %c19 = arith.constant 19 : index
    %c0_62 = arith.constant 0 : index
    %c0_63 = arith.constant 0 : index
    %171 = vector.load %arg3[%c19, %c0_62, %c0_63] : memref<36x4x1xf32, #tpu.memory_space<vmem>>, vector<1x4x1xf32>
    %172 = vector.shape_cast %171 : vector<1x4x1xf32> to vector<4x1xf32>
    %173 = vector.extract_strided_slice %149 {offsets = [3, 0], sizes = [1, 256], strides = [1, 1]} : vector<4x256xf32> to vector<1x256xf32>
    %174 = vector.broadcast %172 : vector<4x1xf32> to vector<4x256xf32>
    %175 = vector.broadcast %173 : vector<1x256xf32> to vector<4x256xf32>
    %176 = arith.mulf %174, %175 : vector<4x256xf32>
    %177 = arith.addf %170, %176 : vector<4x256xf32>
    %178 = vector.extract_strided_slice %1 {offsets = [0, 1], sizes = [4, 255], strides = [1, 1]} : vector<4x256xf32> to vector<4x255xf32>
    %cst_64 = arith.constant 0.000000e+00 : f32
    %179 = vector.broadcast %cst_64 : f32 to vector<4x1xf32>
    %180 = tpu.concatenate %178, %179 in 1 : vector<4x255xf32>, vector<4x1xf32> -> vector<4x256xf32>
    %c5_65 = arith.constant 5 : index
    %c0_66 = arith.constant 0 : index
    %c0_67 = arith.constant 0 : index
    %181 = vector.load %arg7[%c5_65, %c0_66, %c0_67] : memref<9x1x256xf32, #tpu.memory_space<vmem>>, vector<1x1x256xf32>
    %182 = vector.shape_cast %181 : vector<1x1x256xf32> to vector<1x256xf32>
    %183 = vector.broadcast %182 : vector<1x256xf32> to vector<4x256xf32>
    %184 = arith.mulf %180, %183 : vector<4x256xf32>
    %c20 = arith.constant 20 : index
    %c0_68 = arith.constant 0 : index
    %c0_69 = arith.constant 0 : index
    %185 = vector.load %arg3[%c20, %c0_68, %c0_69] : memref<36x4x1xf32, #tpu.memory_space<vmem>>, vector<1x4x1xf32>
    %186 = vector.shape_cast %185 : vector<1x4x1xf32> to vector<4x1xf32>
    %187 = vector.extract_strided_slice %184 {offsets = [0, 0], sizes = [1, 256], strides = [1, 1]} : vector<4x256xf32> to vector<1x256xf32>
    %188 = vector.broadcast %186 : vector<4x1xf32> to vector<4x256xf32>
    %189 = vector.broadcast %187 : vector<1x256xf32> to vector<4x256xf32>
    %190 = arith.mulf %188, %189 : vector<4x256xf32>
    %191 = arith.addf %177, %190 : vector<4x256xf32>
    %c21 = arith.constant 21 : index
    %c0_70 = arith.constant 0 : index
    %c0_71 = arith.constant 0 : index
    %192 = vector.load %arg3[%c21, %c0_70, %c0_71] : memref<36x4x1xf32, #tpu.memory_space<vmem>>, vector<1x4x1xf32>
    %193 = vector.shape_cast %192 : vector<1x4x1xf32> to vector<4x1xf32>
    %194 = vector.extract_strided_slice %184 {offsets = [1, 0], sizes = [1, 256], strides = [1, 1]} : vector<4x256xf32> to vector<1x256xf32>
    %195 = vector.broadcast %193 : vector<4x1xf32> to vector<4x256xf32>
    %196 = vector.broadcast %194 : vector<1x256xf32> to vector<4x256xf32>
    %197 = arith.mulf %195, %196 : vector<4x256xf32>
    %198 = arith.addf %191, %197 : vector<4x256xf32>
    %c22 = arith.constant 22 : index
    %c0_72 = arith.constant 0 : index
    %c0_73 = arith.constant 0 : index
    %199 = vector.load %arg3[%c22, %c0_72, %c0_73] : memref<36x4x1xf32, #tpu.memory_space<vmem>>, vector<1x4x1xf32>
    %200 = vector.shape_cast %199 : vector<1x4x1xf32> to vector<4x1xf32>
    %201 = vector.extract_strided_slice %184 {offsets = [2, 0], sizes = [1, 256], strides = [1, 1]} : vector<4x256xf32> to vector<1x256xf32>
    %202 = vector.broadcast %200 : vector<4x1xf32> to vector<4x256xf32>
    %203 = vector.broadcast %201 : vector<1x256xf32> to vector<4x256xf32>
    %204 = arith.mulf %202, %203 : vector<4x256xf32>
    %205 = arith.addf %198, %204 : vector<4x256xf32>
    %c23 = arith.constant 23 : index
    %c0_74 = arith.constant 0 : index
    %c0_75 = arith.constant 0 : index
    %206 = vector.load %arg3[%c23, %c0_74, %c0_75] : memref<36x4x1xf32, #tpu.memory_space<vmem>>, vector<1x4x1xf32>
    %207 = vector.shape_cast %206 : vector<1x4x1xf32> to vector<4x1xf32>
    %208 = vector.extract_strided_slice %184 {offsets = [3, 0], sizes = [1, 256], strides = [1, 1]} : vector<4x256xf32> to vector<1x256xf32>
    %209 = vector.broadcast %207 : vector<4x1xf32> to vector<4x256xf32>
    %210 = vector.broadcast %208 : vector<1x256xf32> to vector<4x256xf32>
    %211 = arith.mulf %209, %210 : vector<4x256xf32>
    %212 = arith.addf %205, %211 : vector<4x256xf32>
    %213 = vector.extract_strided_slice %1 {offsets = [0, 2], sizes = [4, 254], strides = [1, 1]} : vector<4x256xf32> to vector<4x254xf32>
    %cst_76 = arith.constant 0.000000e+00 : f32
    %214 = vector.broadcast %cst_76 : f32 to vector<4x2xf32>
    %215 = tpu.concatenate %213, %214 in 1 : vector<4x254xf32>, vector<4x2xf32> -> vector<4x256xf32>
    %c6_77 = arith.constant 6 : index
    %c0_78 = arith.constant 0 : index
    %c0_79 = arith.constant 0 : index
    %216 = vector.load %arg7[%c6_77, %c0_78, %c0_79] : memref<9x1x256xf32, #tpu.memory_space<vmem>>, vector<1x1x256xf32>
    %217 = vector.shape_cast %216 : vector<1x1x256xf32> to vector<1x256xf32>
    %218 = vector.broadcast %217 : vector<1x256xf32> to vector<4x256xf32>
    %219 = arith.mulf %215, %218 : vector<4x256xf32>
    %c24 = arith.constant 24 : index
    %c0_80 = arith.constant 0 : index
    %c0_81 = arith.constant 0 : index
    %220 = vector.load %arg3[%c24, %c0_80, %c0_81] : memref<36x4x1xf32, #tpu.memory_space<vmem>>, vector<1x4x1xf32>
    %221 = vector.shape_cast %220 : vector<1x4x1xf32> to vector<4x1xf32>
    %222 = vector.extract_strided_slice %219 {offsets = [0, 0], sizes = [1, 256], strides = [1, 1]} : vector<4x256xf32> to vector<1x256xf32>
    %223 = vector.broadcast %221 : vector<4x1xf32> to vector<4x256xf32>
    %224 = vector.broadcast %222 : vector<1x256xf32> to vector<4x256xf32>
    %225 = arith.mulf %223, %224 : vector<4x256xf32>
    %226 = arith.addf %212, %225 : vector<4x256xf32>
    %c25 = arith.constant 25 : index
    %c0_82 = arith.constant 0 : index
    %c0_83 = arith.constant 0 : index
    %227 = vector.load %arg3[%c25, %c0_82, %c0_83] : memref<36x4x1xf32, #tpu.memory_space<vmem>>, vector<1x4x1xf32>
    %228 = vector.shape_cast %227 : vector<1x4x1xf32> to vector<4x1xf32>
    %229 = vector.extract_strided_slice %219 {offsets = [1, 0], sizes = [1, 256], strides = [1, 1]} : vector<4x256xf32> to vector<1x256xf32>
    %230 = vector.broadcast %228 : vector<4x1xf32> to vector<4x256xf32>
    %231 = vector.broadcast %229 : vector<1x256xf32> to vector<4x256xf32>
    %232 = arith.mulf %230, %231 : vector<4x256xf32>
    %233 = arith.addf %226, %232 : vector<4x256xf32>
    %c26 = arith.constant 26 : index
    %c0_84 = arith.constant 0 : index
    %c0_85 = arith.constant 0 : index
    %234 = vector.load %arg3[%c26, %c0_84, %c0_85] : memref<36x4x1xf32, #tpu.memory_space<vmem>>, vector<1x4x1xf32>
    %235 = vector.shape_cast %234 : vector<1x4x1xf32> to vector<4x1xf32>
    %236 = vector.extract_strided_slice %219 {offsets = [2, 0], sizes = [1, 256], strides = [1, 1]} : vector<4x256xf32> to vector<1x256xf32>
    %237 = vector.broadcast %235 : vector<4x1xf32> to vector<4x256xf32>
    %238 = vector.broadcast %236 : vector<1x256xf32> to vector<4x256xf32>
    %239 = arith.mulf %237, %238 : vector<4x256xf32>
    %240 = arith.addf %233, %239 : vector<4x256xf32>
    %c27 = arith.constant 27 : index
    %c0_86 = arith.constant 0 : index
    %c0_87 = arith.constant 0 : index
    %241 = vector.load %arg3[%c27, %c0_86, %c0_87] : memref<36x4x1xf32, #tpu.memory_space<vmem>>, vector<1x4x1xf32>
    %242 = vector.shape_cast %241 : vector<1x4x1xf32> to vector<4x1xf32>
    %243 = vector.extract_strided_slice %219 {offsets = [3, 0], sizes = [1, 256], strides = [1, 1]} : vector<4x256xf32> to vector<1x256xf32>
    %244 = vector.broadcast %242 : vector<4x1xf32> to vector<4x256xf32>
    %245 = vector.broadcast %243 : vector<1x256xf32> to vector<4x256xf32>
    %246 = arith.mulf %244, %245 : vector<4x256xf32>
    %247 = arith.addf %240, %246 : vector<4x256xf32>
    %248 = vector.extract_strided_slice %1 {offsets = [0, 3], sizes = [4, 253], strides = [1, 1]} : vector<4x256xf32> to vector<4x253xf32>
    %cst_88 = arith.constant 0.000000e+00 : f32
    %249 = vector.broadcast %cst_88 : f32 to vector<4x3xf32>
    %250 = tpu.concatenate %248, %249 in 1 : vector<4x253xf32>, vector<4x3xf32> -> vector<4x256xf32>
    %c7_89 = arith.constant 7 : index
    %c0_90 = arith.constant 0 : index
    %c0_91 = arith.constant 0 : index
    %251 = vector.load %arg7[%c7_89, %c0_90, %c0_91] : memref<9x1x256xf32, #tpu.memory_space<vmem>>, vector<1x1x256xf32>
    %252 = vector.shape_cast %251 : vector<1x1x256xf32> to vector<1x256xf32>
    %253 = vector.broadcast %252 : vector<1x256xf32> to vector<4x256xf32>
    %254 = arith.mulf %250, %253 : vector<4x256xf32>
    %c28 = arith.constant 28 : index
    %c0_92 = arith.constant 0 : index
    %c0_93 = arith.constant 0 : index
    %255 = vector.load %arg3[%c28, %c0_92, %c0_93] : memref<36x4x1xf32, #tpu.memory_space<vmem>>, vector<1x4x1xf32>
    %256 = vector.shape_cast %255 : vector<1x4x1xf32> to vector<4x1xf32>
    %257 = vector.extract_strided_slice %254 {offsets = [0, 0], sizes = [1, 256], strides = [1, 1]} : vector<4x256xf32> to vector<1x256xf32>
    %258 = vector.broadcast %256 : vector<4x1xf32> to vector<4x256xf32>
    %259 = vector.broadcast %257 : vector<1x256xf32> to vector<4x256xf32>
    %260 = arith.mulf %258, %259 : vector<4x256xf32>
    %261 = arith.addf %247, %260 : vector<4x256xf32>
    %c29 = arith.constant 29 : index
    %c0_94 = arith.constant 0 : index
    %c0_95 = arith.constant 0 : index
    %262 = vector.load %arg3[%c29, %c0_94, %c0_95] : memref<36x4x1xf32, #tpu.memory_space<vmem>>, vector<1x4x1xf32>
    %263 = vector.shape_cast %262 : vector<1x4x1xf32> to vector<4x1xf32>
    %264 = vector.extract_strided_slice %254 {offsets = [1, 0], sizes = [1, 256], strides = [1, 1]} : vector<4x256xf32> to vector<1x256xf32>
    %265 = vector.broadcast %263 : vector<4x1xf32> to vector<4x256xf32>
    %266 = vector.broadcast %264 : vector<1x256xf32> to vector<4x256xf32>
    %267 = arith.mulf %265, %266 : vector<4x256xf32>
    %268 = arith.addf %261, %267 : vector<4x256xf32>
    %c30 = arith.constant 30 : index
    %c0_96 = arith.constant 0 : index
    %c0_97 = arith.constant 0 : index
    %269 = vector.load %arg3[%c30, %c0_96, %c0_97] : memref<36x4x1xf32, #tpu.memory_space<vmem>>, vector<1x4x1xf32>
    %270 = vector.shape_cast %269 : vector<1x4x1xf32> to vector<4x1xf32>
    %271 = vector.extract_strided_slice %254 {offsets = [2, 0], sizes = [1, 256], strides = [1, 1]} : vector<4x256xf32> to vector<1x256xf32>
    %272 = vector.broadcast %270 : vector<4x1xf32> to vector<4x256xf32>
    %273 = vector.broadcast %271 : vector<1x256xf32> to vector<4x256xf32>
    %274 = arith.mulf %272, %273 : vector<4x256xf32>
    %275 = arith.addf %268, %274 : vector<4x256xf32>
    %c31 = arith.constant 31 : index
    %c0_98 = arith.constant 0 : index
    %c0_99 = arith.constant 0 : index
    %276 = vector.load %arg3[%c31, %c0_98, %c0_99] : memref<36x4x1xf32, #tpu.memory_space<vmem>>, vector<1x4x1xf32>
    %277 = vector.shape_cast %276 : vector<1x4x1xf32> to vector<4x1xf32>
    %278 = vector.extract_strided_slice %254 {offsets = [3, 0], sizes = [1, 256], strides = [1, 1]} : vector<4x256xf32> to vector<1x256xf32>
    %279 = vector.broadcast %277 : vector<4x1xf32> to vector<4x256xf32>
    %280 = vector.broadcast %278 : vector<1x256xf32> to vector<4x256xf32>
    %281 = arith.mulf %279, %280 : vector<4x256xf32>
    %282 = arith.addf %275, %281 : vector<4x256xf32>
    %283 = vector.extract_strided_slice %1 {offsets = [0, 4], sizes = [4, 252], strides = [1, 1]} : vector<4x256xf32> to vector<4x252xf32>
    %cst_100 = arith.constant 0.000000e+00 : f32
    %284 = vector.broadcast %cst_100 : f32 to vector<4x4xf32>
    %285 = tpu.concatenate %283, %284 in 1 : vector<4x252xf32>, vector<4x4xf32> -> vector<4x256xf32>
    %c8_101 = arith.constant 8 : index
    %c0_102 = arith.constant 0 : index
    %c0_103 = arith.constant 0 : index
    %286 = vector.load %arg7[%c8_101, %c0_102, %c0_103] : memref<9x1x256xf32, #tpu.memory_space<vmem>>, vector<1x1x256xf32>
    %287 = vector.shape_cast %286 : vector<1x1x256xf32> to vector<1x256xf32>
    %288 = vector.broadcast %287 : vector<1x256xf32> to vector<4x256xf32>
    %289 = arith.mulf %285, %288 : vector<4x256xf32>
    %c32 = arith.constant 32 : index
    %c0_104 = arith.constant 0 : index
    %c0_105 = arith.constant 0 : index
    %290 = vector.load %arg3[%c32, %c0_104, %c0_105] : memref<36x4x1xf32, #tpu.memory_space<vmem>>, vector<1x4x1xf32>
    %291 = vector.shape_cast %290 : vector<1x4x1xf32> to vector<4x1xf32>
    %292 = vector.extract_strided_slice %289 {offsets = [0, 0], sizes = [1, 256], strides = [1, 1]} : vector<4x256xf32> to vector<1x256xf32>
    %293 = vector.broadcast %291 : vector<4x1xf32> to vector<4x256xf32>
    %294 = vector.broadcast %292 : vector<1x256xf32> to vector<4x256xf32>
    %295 = arith.mulf %293, %294 : vector<4x256xf32>
    %296 = arith.addf %282, %295 : vector<4x256xf32>
    %c33 = arith.constant 33 : index
    %c0_106 = arith.constant 0 : index
    %c0_107 = arith.constant 0 : index
    %297 = vector.load %arg3[%c33, %c0_106, %c0_107] : memref<36x4x1xf32, #tpu.memory_space<vmem>>, vector<1x4x1xf32>
    %298 = vector.shape_cast %297 : vector<1x4x1xf32> to vector<4x1xf32>
    %299 = vector.extract_strided_slice %289 {offsets = [1, 0], sizes = [1, 256], strides = [1, 1]} : vector<4x256xf32> to vector<1x256xf32>
    %300 = vector.broadcast %298 : vector<4x1xf32> to vector<4x256xf32>
    %301 = vector.broadcast %299 : vector<1x256xf32> to vector<4x256xf32>
    %302 = arith.mulf %300, %301 : vector<4x256xf32>
    %303 = arith.addf %296, %302 : vector<4x256xf32>
    %c34 = arith.constant 34 : index
    %c0_108 = arith.constant 0 : index
    %c0_109 = arith.constant 0 : index
    %304 = vector.load %arg3[%c34, %c0_108, %c0_109] : memref<36x4x1xf32, #tpu.memory_space<vmem>>, vector<1x4x1xf32>
    %305 = vector.shape_cast %304 : vector<1x4x1xf32> to vector<4x1xf32>
    %306 = vector.extract_strided_slice %289 {offsets = [2, 0], sizes = [1, 256], strides = [1, 1]} : vector<4x256xf32> to vector<1x256xf32>
    %307 = vector.broadcast %305 : vector<4x1xf32> to vector<4x256xf32>
    %308 = vector.broadcast %306 : vector<1x256xf32> to vector<4x256xf32>
    %309 = arith.mulf %307, %308 : vector<4x256xf32>
    %310 = arith.addf %303, %309 : vector<4x256xf32>
    %c35 = arith.constant 35 : index
    %c0_110 = arith.constant 0 : index
    %c0_111 = arith.constant 0 : index
    %311 = vector.load %arg3[%c35, %c0_110, %c0_111] : memref<36x4x1xf32, #tpu.memory_space<vmem>>, vector<1x4x1xf32>
    %312 = vector.shape_cast %311 : vector<1x4x1xf32> to vector<4x1xf32>
    %313 = vector.extract_strided_slice %289 {offsets = [3, 0], sizes = [1, 256], strides = [1, 1]} : vector<4x256xf32> to vector<1x256xf32>
    %314 = vector.broadcast %312 : vector<4x1xf32> to vector<4x256xf32>
    %315 = vector.broadcast %313 : vector<1x256xf32> to vector<4x256xf32>
    %316 = arith.mulf %314, %315 : vector<4x256xf32>
    %317 = arith.addf %310, %316 : vector<4x256xf32>
    %cst_112 = arith.constant 0.000000e+00 : f32
    %318 = vector.broadcast %cst_112 : f32 to vector<4x256xf32>
    %319 = arith.maximumf %317, %318 : vector<4x256xf32>
    %cst_113 = arith.constant 0.000000e+00 : f32
    %320 = vector.broadcast %cst_113 : f32 to vector<4x256xf32>
    %c0_114 = arith.constant 0 : index
    %c0_115 = arith.constant 0 : index
    %321 = vector.load %arg6[%c0_114, %c0_115] : memref<4x1xf32, #tpu.memory_space<vmem>>, vector<4x1xf32>
    %322 = vector.broadcast %321 : vector<4x1xf32> to vector<4x256xf32>
    %323 = arith.addf %320, %322 : vector<4x256xf32>
    %cst_116 = arith.constant 0.000000e+00 : f32
    %324 = vector.broadcast %cst_116 : f32 to vector<4x4xf32>
    %325 = vector.extract_strided_slice %319 {offsets = [0, 0], sizes = [4, 252], strides = [1, 1]} : vector<4x256xf32> to vector<4x252xf32>
    %326 = tpu.concatenate %324, %325 in 1 : vector<4x4xf32>, vector<4x252xf32> -> vector<4x256xf32>
    %c0_117 = arith.constant 0 : index
    %c0_118 = arith.constant 0 : index
    %c0_119 = arith.constant 0 : index
    %327 = vector.load %arg7[%c0_117, %c0_118, %c0_119] : memref<9x1x256xf32, #tpu.memory_space<vmem>>, vector<1x1x256xf32>
    %328 = vector.shape_cast %327 : vector<1x1x256xf32> to vector<1x256xf32>
    %329 = vector.broadcast %328 : vector<1x256xf32> to vector<4x256xf32>
    %330 = arith.mulf %326, %329 : vector<4x256xf32>
    %c0_120 = arith.constant 0 : index
    %c0_121 = arith.constant 0 : index
    %c0_122 = arith.constant 0 : index
    %331 = vector.load %arg5[%c0_120, %c0_121, %c0_122] : memref<36x4x1xf32, #tpu.memory_space<vmem>>, vector<1x4x1xf32>
    %332 = vector.shape_cast %331 : vector<1x4x1xf32> to vector<4x1xf32>
    %333 = vector.extract_strided_slice %330 {offsets = [0, 0], sizes = [1, 256], strides = [1, 1]} : vector<4x256xf32> to vector<1x256xf32>
    %334 = vector.broadcast %332 : vector<4x1xf32> to vector<4x256xf32>
    %335 = vector.broadcast %333 : vector<1x256xf32> to vector<4x256xf32>
    %336 = arith.mulf %334, %335 : vector<4x256xf32>
    %337 = arith.addf %323, %336 : vector<4x256xf32>
    %c1_123 = arith.constant 1 : index
    %c0_124 = arith.constant 0 : index
    %c0_125 = arith.constant 0 : index
    %338 = vector.load %arg5[%c1_123, %c0_124, %c0_125] : memref<36x4x1xf32, #tpu.memory_space<vmem>>, vector<1x4x1xf32>
    %339 = vector.shape_cast %338 : vector<1x4x1xf32> to vector<4x1xf32>
    %340 = vector.extract_strided_slice %330 {offsets = [1, 0], sizes = [1, 256], strides = [1, 1]} : vector<4x256xf32> to vector<1x256xf32>
    %341 = vector.broadcast %339 : vector<4x1xf32> to vector<4x256xf32>
    %342 = vector.broadcast %340 : vector<1x256xf32> to vector<4x256xf32>
    %343 = arith.mulf %341, %342 : vector<4x256xf32>
    %344 = arith.addf %337, %343 : vector<4x256xf32>
    %c2_126 = arith.constant 2 : index
    %c0_127 = arith.constant 0 : index
    %c0_128 = arith.constant 0 : index
    %345 = vector.load %arg5[%c2_126, %c0_127, %c0_128] : memref<36x4x1xf32, #tpu.memory_space<vmem>>, vector<1x4x1xf32>
    %346 = vector.shape_cast %345 : vector<1x4x1xf32> to vector<4x1xf32>
    %347 = vector.extract_strided_slice %330 {offsets = [2, 0], sizes = [1, 256], strides = [1, 1]} : vector<4x256xf32> to vector<1x256xf32>
    %348 = vector.broadcast %346 : vector<4x1xf32> to vector<4x256xf32>
    %349 = vector.broadcast %347 : vector<1x256xf32> to vector<4x256xf32>
    %350 = arith.mulf %348, %349 : vector<4x256xf32>
    %351 = arith.addf %344, %350 : vector<4x256xf32>
    %c3_129 = arith.constant 3 : index
    %c0_130 = arith.constant 0 : index
    %c0_131 = arith.constant 0 : index
    %352 = vector.load %arg5[%c3_129, %c0_130, %c0_131] : memref<36x4x1xf32, #tpu.memory_space<vmem>>, vector<1x4x1xf32>
    %353 = vector.shape_cast %352 : vector<1x4x1xf32> to vector<4x1xf32>
    %354 = vector.extract_strided_slice %330 {offsets = [3, 0], sizes = [1, 256], strides = [1, 1]} : vector<4x256xf32> to vector<1x256xf32>
    %355 = vector.broadcast %353 : vector<4x1xf32> to vector<4x256xf32>
    %356 = vector.broadcast %354 : vector<1x256xf32> to vector<4x256xf32>
    %357 = arith.mulf %355, %356 : vector<4x256xf32>
    %358 = arith.addf %351, %357 : vector<4x256xf32>
    %cst_132 = arith.constant 0.000000e+00 : f32
    %359 = vector.broadcast %cst_132 : f32 to vector<4x3xf32>
    %360 = vector.extract_strided_slice %319 {offsets = [0, 0], sizes = [4, 253], strides = [1, 1]} : vector<4x256xf32> to vector<4x253xf32>
    %361 = tpu.concatenate %359, %360 in 1 : vector<4x3xf32>, vector<4x253xf32> -> vector<4x256xf32>
    %c1_133 = arith.constant 1 : index
    %c0_134 = arith.constant 0 : index
    %c0_135 = arith.constant 0 : index
    %362 = vector.load %arg7[%c1_133, %c0_134, %c0_135] : memref<9x1x256xf32, #tpu.memory_space<vmem>>, vector<1x1x256xf32>
    %363 = vector.shape_cast %362 : vector<1x1x256xf32> to vector<1x256xf32>
    %364 = vector.broadcast %363 : vector<1x256xf32> to vector<4x256xf32>
    %365 = arith.mulf %361, %364 : vector<4x256xf32>
    %c4_136 = arith.constant 4 : index
    %c0_137 = arith.constant 0 : index
    %c0_138 = arith.constant 0 : index
    %366 = vector.load %arg5[%c4_136, %c0_137, %c0_138] : memref<36x4x1xf32, #tpu.memory_space<vmem>>, vector<1x4x1xf32>
    %367 = vector.shape_cast %366 : vector<1x4x1xf32> to vector<4x1xf32>
    %368 = vector.extract_strided_slice %365 {offsets = [0, 0], sizes = [1, 256], strides = [1, 1]} : vector<4x256xf32> to vector<1x256xf32>
    %369 = vector.broadcast %367 : vector<4x1xf32> to vector<4x256xf32>
    %370 = vector.broadcast %368 : vector<1x256xf32> to vector<4x256xf32>
    %371 = arith.mulf %369, %370 : vector<4x256xf32>
    %372 = arith.addf %358, %371 : vector<4x256xf32>
    %c5_139 = arith.constant 5 : index
    %c0_140 = arith.constant 0 : index
    %c0_141 = arith.constant 0 : index
    %373 = vector.load %arg5[%c5_139, %c0_140, %c0_141] : memref<36x4x1xf32, #tpu.memory_space<vmem>>, vector<1x4x1xf32>
    %374 = vector.shape_cast %373 : vector<1x4x1xf32> to vector<4x1xf32>
    %375 = vector.extract_strided_slice %365 {offsets = [1, 0], sizes = [1, 256], strides = [1, 1]} : vector<4x256xf32> to vector<1x256xf32>
    %376 = vector.broadcast %374 : vector<4x1xf32> to vector<4x256xf32>
    %377 = vector.broadcast %375 : vector<1x256xf32> to vector<4x256xf32>
    %378 = arith.mulf %376, %377 : vector<4x256xf32>
    %379 = arith.addf %372, %378 : vector<4x256xf32>
    %c6_142 = arith.constant 6 : index
    %c0_143 = arith.constant 0 : index
    %c0_144 = arith.constant 0 : index
    %380 = vector.load %arg5[%c6_142, %c0_143, %c0_144] : memref<36x4x1xf32, #tpu.memory_space<vmem>>, vector<1x4x1xf32>
    %381 = vector.shape_cast %380 : vector<1x4x1xf32> to vector<4x1xf32>
    %382 = vector.extract_strided_slice %365 {offsets = [2, 0], sizes = [1, 256], strides = [1, 1]} : vector<4x256xf32> to vector<1x256xf32>
    %383 = vector.broadcast %381 : vector<4x1xf32> to vector<4x256xf32>
    %384 = vector.broadcast %382 : vector<1x256xf32> to vector<4x256xf32>
    %385 = arith.mulf %383, %384 : vector<4x256xf32>
    %386 = arith.addf %379, %385 : vector<4x256xf32>
    %c7_145 = arith.constant 7 : index
    %c0_146 = arith.constant 0 : index
    %c0_147 = arith.constant 0 : index
    %387 = vector.load %arg5[%c7_145, %c0_146, %c0_147] : memref<36x4x1xf32, #tpu.memory_space<vmem>>, vector<1x4x1xf32>
    %388 = vector.shape_cast %387 : vector<1x4x1xf32> to vector<4x1xf32>
    %389 = vector.extract_strided_slice %365 {offsets = [3, 0], sizes = [1, 256], strides = [1, 1]} : vector<4x256xf32> to vector<1x256xf32>
    %390 = vector.broadcast %388 : vector<4x1xf32> to vector<4x256xf32>
    %391 = vector.broadcast %389 : vector<1x256xf32> to vector<4x256xf32>
    %392 = arith.mulf %390, %391 : vector<4x256xf32>
    %393 = arith.addf %386, %392 : vector<4x256xf32>
    %cst_148 = arith.constant 0.000000e+00 : f32
    %394 = vector.broadcast %cst_148 : f32 to vector<4x2xf32>
    %395 = vector.extract_strided_slice %319 {offsets = [0, 0], sizes = [4, 254], strides = [1, 1]} : vector<4x256xf32> to vector<4x254xf32>
    %396 = tpu.concatenate %394, %395 in 1 : vector<4x2xf32>, vector<4x254xf32> -> vector<4x256xf32>
    %c2_149 = arith.constant 2 : index
    %c0_150 = arith.constant 0 : index
    %c0_151 = arith.constant 0 : index
    %397 = vector.load %arg7[%c2_149, %c0_150, %c0_151] : memref<9x1x256xf32, #tpu.memory_space<vmem>>, vector<1x1x256xf32>
    %398 = vector.shape_cast %397 : vector<1x1x256xf32> to vector<1x256xf32>
    %399 = vector.broadcast %398 : vector<1x256xf32> to vector<4x256xf32>
    %400 = arith.mulf %396, %399 : vector<4x256xf32>
    %c8_152 = arith.constant 8 : index
    %c0_153 = arith.constant 0 : index
    %c0_154 = arith.constant 0 : index
    %401 = vector.load %arg5[%c8_152, %c0_153, %c0_154] : memref<36x4x1xf32, #tpu.memory_space<vmem>>, vector<1x4x1xf32>
    %402 = vector.shape_cast %401 : vector<1x4x1xf32> to vector<4x1xf32>
    %403 = vector.extract_strided_slice %400 {offsets = [0, 0], sizes = [1, 256], strides = [1, 1]} : vector<4x256xf32> to vector<1x256xf32>
    %404 = vector.broadcast %402 : vector<4x1xf32> to vector<4x256xf32>
    %405 = vector.broadcast %403 : vector<1x256xf32> to vector<4x256xf32>
    %406 = arith.mulf %404, %405 : vector<4x256xf32>
    %407 = arith.addf %393, %406 : vector<4x256xf32>
    %c9_155 = arith.constant 9 : index
    %c0_156 = arith.constant 0 : index
    %c0_157 = arith.constant 0 : index
    %408 = vector.load %arg5[%c9_155, %c0_156, %c0_157] : memref<36x4x1xf32, #tpu.memory_space<vmem>>, vector<1x4x1xf32>
    %409 = vector.shape_cast %408 : vector<1x4x1xf32> to vector<4x1xf32>
    %410 = vector.extract_strided_slice %400 {offsets = [1, 0], sizes = [1, 256], strides = [1, 1]} : vector<4x256xf32> to vector<1x256xf32>
    %411 = vector.broadcast %409 : vector<4x1xf32> to vector<4x256xf32>
    %412 = vector.broadcast %410 : vector<1x256xf32> to vector<4x256xf32>
    %413 = arith.mulf %411, %412 : vector<4x256xf32>
    %414 = arith.addf %407, %413 : vector<4x256xf32>
    %c10_158 = arith.constant 10 : index
    %c0_159 = arith.constant 0 : index
    %c0_160 = arith.constant 0 : index
    %415 = vector.load %arg5[%c10_158, %c0_159, %c0_160] : memref<36x4x1xf32, #tpu.memory_space<vmem>>, vector<1x4x1xf32>
    %416 = vector.shape_cast %415 : vector<1x4x1xf32> to vector<4x1xf32>
    %417 = vector.extract_strided_slice %400 {offsets = [2, 0], sizes = [1, 256], strides = [1, 1]} : vector<4x256xf32> to vector<1x256xf32>
    %418 = vector.broadcast %416 : vector<4x1xf32> to vector<4x256xf32>
    %419 = vector.broadcast %417 : vector<1x256xf32> to vector<4x256xf32>
    %420 = arith.mulf %418, %419 : vector<4x256xf32>
    %421 = arith.addf %414, %420 : vector<4x256xf32>
    %c11_161 = arith.constant 11 : index
    %c0_162 = arith.constant 0 : index
    %c0_163 = arith.constant 0 : index
    %422 = vector.load %arg5[%c11_161, %c0_162, %c0_163] : memref<36x4x1xf32, #tpu.memory_space<vmem>>, vector<1x4x1xf32>
    %423 = vector.shape_cast %422 : vector<1x4x1xf32> to vector<4x1xf32>
    %424 = vector.extract_strided_slice %400 {offsets = [3, 0], sizes = [1, 256], strides = [1, 1]} : vector<4x256xf32> to vector<1x256xf32>
    %425 = vector.broadcast %423 : vector<4x1xf32> to vector<4x256xf32>
    %426 = vector.broadcast %424 : vector<1x256xf32> to vector<4x256xf32>
    %427 = arith.mulf %425, %426 : vector<4x256xf32>
    %428 = arith.addf %421, %427 : vector<4x256xf32>
    %cst_164 = arith.constant 0.000000e+00 : f32
    %429 = vector.broadcast %cst_164 : f32 to vector<4x1xf32>
    %430 = vector.extract_strided_slice %319 {offsets = [0, 0], sizes = [4, 255], strides = [1, 1]} : vector<4x256xf32> to vector<4x255xf32>
    %431 = tpu.concatenate %429, %430 in 1 : vector<4x1xf32>, vector<4x255xf32> -> vector<4x256xf32>
    %c3_165 = arith.constant 3 : index
    %c0_166 = arith.constant 0 : index
    %c0_167 = arith.constant 0 : index
    %432 = vector.load %arg7[%c3_165, %c0_166, %c0_167] : memref<9x1x256xf32, #tpu.memory_space<vmem>>, vector<1x1x256xf32>
    %433 = vector.shape_cast %432 : vector<1x1x256xf32> to vector<1x256xf32>
    %434 = vector.broadcast %433 : vector<1x256xf32> to vector<4x256xf32>
    %435 = arith.mulf %431, %434 : vector<4x256xf32>
    %c12_168 = arith.constant 12 : index
    %c0_169 = arith.constant 0 : index
    %c0_170 = arith.constant 0 : index
    %436 = vector.load %arg5[%c12_168, %c0_169, %c0_170] : memref<36x4x1xf32, #tpu.memory_space<vmem>>, vector<1x4x1xf32>
    %437 = vector.shape_cast %436 : vector<1x4x1xf32> to vector<4x1xf32>
    %438 = vector.extract_strided_slice %435 {offsets = [0, 0], sizes = [1, 256], strides = [1, 1]} : vector<4x256xf32> to vector<1x256xf32>
    %439 = vector.broadcast %437 : vector<4x1xf32> to vector<4x256xf32>
    %440 = vector.broadcast %438 : vector<1x256xf32> to vector<4x256xf32>
    %441 = arith.mulf %439, %440 : vector<4x256xf32>
    %442 = arith.addf %428, %441 : vector<4x256xf32>
    %c13_171 = arith.constant 13 : index
    %c0_172 = arith.constant 0 : index
    %c0_173 = arith.constant 0 : index
    %443 = vector.load %arg5[%c13_171, %c0_172, %c0_173] : memref<36x4x1xf32, #tpu.memory_space<vmem>>, vector<1x4x1xf32>
    %444 = vector.shape_cast %443 : vector<1x4x1xf32> to vector<4x1xf32>
    %445 = vector.extract_strided_slice %435 {offsets = [1, 0], sizes = [1, 256], strides = [1, 1]} : vector<4x256xf32> to vector<1x256xf32>
    %446 = vector.broadcast %444 : vector<4x1xf32> to vector<4x256xf32>
    %447 = vector.broadcast %445 : vector<1x256xf32> to vector<4x256xf32>
    %448 = arith.mulf %446, %447 : vector<4x256xf32>
    %449 = arith.addf %442, %448 : vector<4x256xf32>
    %c14_174 = arith.constant 14 : index
    %c0_175 = arith.constant 0 : index
    %c0_176 = arith.constant 0 : index
    %450 = vector.load %arg5[%c14_174, %c0_175, %c0_176] : memref<36x4x1xf32, #tpu.memory_space<vmem>>, vector<1x4x1xf32>
    %451 = vector.shape_cast %450 : vector<1x4x1xf32> to vector<4x1xf32>
    %452 = vector.extract_strided_slice %435 {offsets = [2, 0], sizes = [1, 256], strides = [1, 1]} : vector<4x256xf32> to vector<1x256xf32>
    %453 = vector.broadcast %451 : vector<4x1xf32> to vector<4x256xf32>
    %454 = vector.broadcast %452 : vector<1x256xf32> to vector<4x256xf32>
    %455 = arith.mulf %453, %454 : vector<4x256xf32>
    %456 = arith.addf %449, %455 : vector<4x256xf32>
    %c15_177 = arith.constant 15 : index
    %c0_178 = arith.constant 0 : index
    %c0_179 = arith.constant 0 : index
    %457 = vector.load %arg5[%c15_177, %c0_178, %c0_179] : memref<36x4x1xf32, #tpu.memory_space<vmem>>, vector<1x4x1xf32>
    %458 = vector.shape_cast %457 : vector<1x4x1xf32> to vector<4x1xf32>
    %459 = vector.extract_strided_slice %435 {offsets = [3, 0], sizes = [1, 256], strides = [1, 1]} : vector<4x256xf32> to vector<1x256xf32>
    %460 = vector.broadcast %458 : vector<4x1xf32> to vector<4x256xf32>
    %461 = vector.broadcast %459 : vector<1x256xf32> to vector<4x256xf32>
    %462 = arith.mulf %460, %461 : vector<4x256xf32>
    %463 = arith.addf %456, %462 : vector<4x256xf32>
    %c4_180 = arith.constant 4 : index
    %c0_181 = arith.constant 0 : index
    %c0_182 = arith.constant 0 : index
    %464 = vector.load %arg7[%c4_180, %c0_181, %c0_182] : memref<9x1x256xf32, #tpu.memory_space<vmem>>, vector<1x1x256xf32>
    %465 = vector.shape_cast %464 : vector<1x1x256xf32> to vector<1x256xf32>
    %466 = vector.broadcast %465 : vector<1x256xf32> to vector<4x256xf32>
    %467 = arith.mulf %319, %466 : vector<4x256xf32>
    %c16_183 = arith.constant 16 : index
    %c0_184 = arith.constant 0 : index
    %c0_185 = arith.constant 0 : index
    %468 = vector.load %arg5[%c16_183, %c0_184, %c0_185] : memref<36x4x1xf32, #tpu.memory_space<vmem>>, vector<1x4x1xf32>
    %469 = vector.shape_cast %468 : vector<1x4x1xf32> to vector<4x1xf32>
    %470 = vector.extract_strided_slice %467 {offsets = [0, 0], sizes = [1, 256], strides = [1, 1]} : vector<4x256xf32> to vector<1x256xf32>
    %471 = vector.broadcast %469 : vector<4x1xf32> to vector<4x256xf32>
    %472 = vector.broadcast %470 : vector<1x256xf32> to vector<4x256xf32>
    %473 = arith.mulf %471, %472 : vector<4x256xf32>
    %474 = arith.addf %463, %473 : vector<4x256xf32>
    %c17_186 = arith.constant 17 : index
    %c0_187 = arith.constant 0 : index
    %c0_188 = arith.constant 0 : index
    %475 = vector.load %arg5[%c17_186, %c0_187, %c0_188] : memref<36x4x1xf32, #tpu.memory_space<vmem>>, vector<1x4x1xf32>
    %476 = vector.shape_cast %475 : vector<1x4x1xf32> to vector<4x1xf32>
    %477 = vector.extract_strided_slice %467 {offsets = [1, 0], sizes = [1, 256], strides = [1, 1]} : vector<4x256xf32> to vector<1x256xf32>
    %478 = vector.broadcast %476 : vector<4x1xf32> to vector<4x256xf32>
    %479 = vector.broadcast %477 : vector<1x256xf32> to vector<4x256xf32>
    %480 = arith.mulf %478, %479 : vector<4x256xf32>
    %481 = arith.addf %474, %480 : vector<4x256xf32>
    %c18_189 = arith.constant 18 : index
    %c0_190 = arith.constant 0 : index
    %c0_191 = arith.constant 0 : index
    %482 = vector.load %arg5[%c18_189, %c0_190, %c0_191] : memref<36x4x1xf32, #tpu.memory_space<vmem>>, vector<1x4x1xf32>
    %483 = vector.shape_cast %482 : vector<1x4x1xf32> to vector<4x1xf32>
    %484 = vector.extract_strided_slice %467 {offsets = [2, 0], sizes = [1, 256], strides = [1, 1]} : vector<4x256xf32> to vector<1x256xf32>
    %485 = vector.broadcast %483 : vector<4x1xf32> to vector<4x256xf32>
    %486 = vector.broadcast %484 : vector<1x256xf32> to vector<4x256xf32>
    %487 = arith.mulf %485, %486 : vector<4x256xf32>
    %488 = arith.addf %481, %487 : vector<4x256xf32>
    %c19_192 = arith.constant 19 : index
    %c0_193 = arith.constant 0 : index
    %c0_194 = arith.constant 0 : index
    %489 = vector.load %arg5[%c19_192, %c0_193, %c0_194] : memref<36x4x1xf32, #tpu.memory_space<vmem>>, vector<1x4x1xf32>
    %490 = vector.shape_cast %489 : vector<1x4x1xf32> to vector<4x1xf32>
    %491 = vector.extract_strided_slice %467 {offsets = [3, 0], sizes = [1, 256], strides = [1, 1]} : vector<4x256xf32> to vector<1x256xf32>
    %492 = vector.broadcast %490 : vector<4x1xf32> to vector<4x256xf32>
    %493 = vector.broadcast %491 : vector<1x256xf32> to vector<4x256xf32>
    %494 = arith.mulf %492, %493 : vector<4x256xf32>
    %495 = arith.addf %488, %494 : vector<4x256xf32>
    %496 = vector.extract_strided_slice %319 {offsets = [0, 1], sizes = [4, 255], strides = [1, 1]} : vector<4x256xf32> to vector<4x255xf32>
    %cst_195 = arith.constant 0.000000e+00 : f32
    %497 = vector.broadcast %cst_195 : f32 to vector<4x1xf32>
    %498 = tpu.concatenate %496, %497 in 1 : vector<4x255xf32>, vector<4x1xf32> -> vector<4x256xf32>
    %c5_196 = arith.constant 5 : index
    %c0_197 = arith.constant 0 : index
    %c0_198 = arith.constant 0 : index
    %499 = vector.load %arg7[%c5_196, %c0_197, %c0_198] : memref<9x1x256xf32, #tpu.memory_space<vmem>>, vector<1x1x256xf32>
    %500 = vector.shape_cast %499 : vector<1x1x256xf32> to vector<1x256xf32>
    %501 = vector.broadcast %500 : vector<1x256xf32> to vector<4x256xf32>
    %502 = arith.mulf %498, %501 : vector<4x256xf32>
    %c20_199 = arith.constant 20 : index
    %c0_200 = arith.constant 0 : index
    %c0_201 = arith.constant 0 : index
    %503 = vector.load %arg5[%c20_199, %c0_200, %c0_201] : memref<36x4x1xf32, #tpu.memory_space<vmem>>, vector<1x4x1xf32>
    %504 = vector.shape_cast %503 : vector<1x4x1xf32> to vector<4x1xf32>
    %505 = vector.extract_strided_slice %502 {offsets = [0, 0], sizes = [1, 256], strides = [1, 1]} : vector<4x256xf32> to vector<1x256xf32>
    %506 = vector.broadcast %504 : vector<4x1xf32> to vector<4x256xf32>
    %507 = vector.broadcast %505 : vector<1x256xf32> to vector<4x256xf32>
    %508 = arith.mulf %506, %507 : vector<4x256xf32>
    %509 = arith.addf %495, %508 : vector<4x256xf32>
    %c21_202 = arith.constant 21 : index
    %c0_203 = arith.constant 0 : index
    %c0_204 = arith.constant 0 : index
    %510 = vector.load %arg5[%c21_202, %c0_203, %c0_204] : memref<36x4x1xf32, #tpu.memory_space<vmem>>, vector<1x4x1xf32>
    %511 = vector.shape_cast %510 : vector<1x4x1xf32> to vector<4x1xf32>
    %512 = vector.extract_strided_slice %502 {offsets = [1, 0], sizes = [1, 256], strides = [1, 1]} : vector<4x256xf32> to vector<1x256xf32>
    %513 = vector.broadcast %511 : vector<4x1xf32> to vector<4x256xf32>
    %514 = vector.broadcast %512 : vector<1x256xf32> to vector<4x256xf32>
    %515 = arith.mulf %513, %514 : vector<4x256xf32>
    %516 = arith.addf %509, %515 : vector<4x256xf32>
    %c22_205 = arith.constant 22 : index
    %c0_206 = arith.constant 0 : index
    %c0_207 = arith.constant 0 : index
    %517 = vector.load %arg5[%c22_205, %c0_206, %c0_207] : memref<36x4x1xf32, #tpu.memory_space<vmem>>, vector<1x4x1xf32>
    %518 = vector.shape_cast %517 : vector<1x4x1xf32> to vector<4x1xf32>
    %519 = vector.extract_strided_slice %502 {offsets = [2, 0], sizes = [1, 256], strides = [1, 1]} : vector<4x256xf32> to vector<1x256xf32>
    %520 = vector.broadcast %518 : vector<4x1xf32> to vector<4x256xf32>
    %521 = vector.broadcast %519 : vector<1x256xf32> to vector<4x256xf32>
    %522 = arith.mulf %520, %521 : vector<4x256xf32>
    %523 = arith.addf %516, %522 : vector<4x256xf32>
    %c23_208 = arith.constant 23 : index
    %c0_209 = arith.constant 0 : index
    %c0_210 = arith.constant 0 : index
    %524 = vector.load %arg5[%c23_208, %c0_209, %c0_210] : memref<36x4x1xf32, #tpu.memory_space<vmem>>, vector<1x4x1xf32>
    %525 = vector.shape_cast %524 : vector<1x4x1xf32> to vector<4x1xf32>
    %526 = vector.extract_strided_slice %502 {offsets = [3, 0], sizes = [1, 256], strides = [1, 1]} : vector<4x256xf32> to vector<1x256xf32>
    %527 = vector.broadcast %525 : vector<4x1xf32> to vector<4x256xf32>
    %528 = vector.broadcast %526 : vector<1x256xf32> to vector<4x256xf32>
    %529 = arith.mulf %527, %528 : vector<4x256xf32>
    %530 = arith.addf %523, %529 : vector<4x256xf32>
    %531 = vector.extract_strided_slice %319 {offsets = [0, 2], sizes = [4, 254], strides = [1, 1]} : vector<4x256xf32> to vector<4x254xf32>
    %cst_211 = arith.constant 0.000000e+00 : f32
    %532 = vector.broadcast %cst_211 : f32 to vector<4x2xf32>
    %533 = tpu.concatenate %531, %532 in 1 : vector<4x254xf32>, vector<4x2xf32> -> vector<4x256xf32>
    %c6_212 = arith.constant 6 : index
    %c0_213 = arith.constant 0 : index
    %c0_214 = arith.constant 0 : index
    %534 = vector.load %arg7[%c6_212, %c0_213, %c0_214] : memref<9x1x256xf32, #tpu.memory_space<vmem>>, vector<1x1x256xf32>
    %535 = vector.shape_cast %534 : vector<1x1x256xf32> to vector<1x256xf32>
    %536 = vector.broadcast %535 : vector<1x256xf32> to vector<4x256xf32>
    %537 = arith.mulf %533, %536 : vector<4x256xf32>
    %c24_215 = arith.constant 24 : index
    %c0_216 = arith.constant 0 : index
    %c0_217 = arith.constant 0 : index
    %538 = vector.load %arg5[%c24_215, %c0_216, %c0_217] : memref<36x4x1xf32, #tpu.memory_space<vmem>>, vector<1x4x1xf32>
    %539 = vector.shape_cast %538 : vector<1x4x1xf32> to vector<4x1xf32>
    %540 = vector.extract_strided_slice %537 {offsets = [0, 0], sizes = [1, 256], strides = [1, 1]} : vector<4x256xf32> to vector<1x256xf32>
    %541 = vector.broadcast %539 : vector<4x1xf32> to vector<4x256xf32>
    %542 = vector.broadcast %540 : vector<1x256xf32> to vector<4x256xf32>
    %543 = arith.mulf %541, %542 : vector<4x256xf32>
    %544 = arith.addf %530, %543 : vector<4x256xf32>
    %c25_218 = arith.constant 25 : index
    %c0_219 = arith.constant 0 : index
    %c0_220 = arith.constant 0 : index
    %545 = vector.load %arg5[%c25_218, %c0_219, %c0_220] : memref<36x4x1xf32, #tpu.memory_space<vmem>>, vector<1x4x1xf32>
    %546 = vector.shape_cast %545 : vector<1x4x1xf32> to vector<4x1xf32>
    %547 = vector.extract_strided_slice %537 {offsets = [1, 0], sizes = [1, 256], strides = [1, 1]} : vector<4x256xf32> to vector<1x256xf32>
    %548 = vector.broadcast %546 : vector<4x1xf32> to vector<4x256xf32>
    %549 = vector.broadcast %547 : vector<1x256xf32> to vector<4x256xf32>
    %550 = arith.mulf %548, %549 : vector<4x256xf32>
    %551 = arith.addf %544, %550 : vector<4x256xf32>
    %c26_221 = arith.constant 26 : index
    %c0_222 = arith.constant 0 : index
    %c0_223 = arith.constant 0 : index
    %552 = vector.load %arg5[%c26_221, %c0_222, %c0_223] : memref<36x4x1xf32, #tpu.memory_space<vmem>>, vector<1x4x1xf32>
    %553 = vector.shape_cast %552 : vector<1x4x1xf32> to vector<4x1xf32>
    %554 = vector.extract_strided_slice %537 {offsets = [2, 0], sizes = [1, 256], strides = [1, 1]} : vector<4x256xf32> to vector<1x256xf32>
    %555 = vector.broadcast %553 : vector<4x1xf32> to vector<4x256xf32>
    %556 = vector.broadcast %554 : vector<1x256xf32> to vector<4x256xf32>
    %557 = arith.mulf %555, %556 : vector<4x256xf32>
    %558 = arith.addf %551, %557 : vector<4x256xf32>
    %c27_224 = arith.constant 27 : index
    %c0_225 = arith.constant 0 : index
    %c0_226 = arith.constant 0 : index
    %559 = vector.load %arg5[%c27_224, %c0_225, %c0_226] : memref<36x4x1xf32, #tpu.memory_space<vmem>>, vector<1x4x1xf32>
    %560 = vector.shape_cast %559 : vector<1x4x1xf32> to vector<4x1xf32>
    %561 = vector.extract_strided_slice %537 {offsets = [3, 0], sizes = [1, 256], strides = [1, 1]} : vector<4x256xf32> to vector<1x256xf32>
    %562 = vector.broadcast %560 : vector<4x1xf32> to vector<4x256xf32>
    %563 = vector.broadcast %561 : vector<1x256xf32> to vector<4x256xf32>
    %564 = arith.mulf %562, %563 : vector<4x256xf32>
    %565 = arith.addf %558, %564 : vector<4x256xf32>
    %566 = vector.extract_strided_slice %319 {offsets = [0, 3], sizes = [4, 253], strides = [1, 1]} : vector<4x256xf32> to vector<4x253xf32>
    %cst_227 = arith.constant 0.000000e+00 : f32
    %567 = vector.broadcast %cst_227 : f32 to vector<4x3xf32>
    %568 = tpu.concatenate %566, %567 in 1 : vector<4x253xf32>, vector<4x3xf32> -> vector<4x256xf32>
    %c7_228 = arith.constant 7 : index
    %c0_229 = arith.constant 0 : index
    %c0_230 = arith.constant 0 : index
    %569 = vector.load %arg7[%c7_228, %c0_229, %c0_230] : memref<9x1x256xf32, #tpu.memory_space<vmem>>, vector<1x1x256xf32>
    %570 = vector.shape_cast %569 : vector<1x1x256xf32> to vector<1x256xf32>
    %571 = vector.broadcast %570 : vector<1x256xf32> to vector<4x256xf32>
    %572 = arith.mulf %568, %571 : vector<4x256xf32>
    %c28_231 = arith.constant 28 : index
    %c0_232 = arith.constant 0 : index
    %c0_233 = arith.constant 0 : index
    %573 = vector.load %arg5[%c28_231, %c0_232, %c0_233] : memref<36x4x1xf32, #tpu.memory_space<vmem>>, vector<1x4x1xf32>
    %574 = vector.shape_cast %573 : vector<1x4x1xf32> to vector<4x1xf32>
    %575 = vector.extract_strided_slice %572 {offsets = [0, 0], sizes = [1, 256], strides = [1, 1]} : vector<4x256xf32> to vector<1x256xf32>
    %576 = vector.broadcast %574 : vector<4x1xf32> to vector<4x256xf32>
    %577 = vector.broadcast %575 : vector<1x256xf32> to vector<4x256xf32>
    %578 = arith.mulf %576, %577 : vector<4x256xf32>
    %579 = arith.addf %565, %578 : vector<4x256xf32>
    %c29_234 = arith.constant 29 : index
    %c0_235 = arith.constant 0 : index
    %c0_236 = arith.constant 0 : index
    %580 = vector.load %arg5[%c29_234, %c0_235, %c0_236] : memref<36x4x1xf32, #tpu.memory_space<vmem>>, vector<1x4x1xf32>
    %581 = vector.shape_cast %580 : vector<1x4x1xf32> to vector<4x1xf32>
    %582 = vector.extract_strided_slice %572 {offsets = [1, 0], sizes = [1, 256], strides = [1, 1]} : vector<4x256xf32> to vector<1x256xf32>
    %583 = vector.broadcast %581 : vector<4x1xf32> to vector<4x256xf32>
    %584 = vector.broadcast %582 : vector<1x256xf32> to vector<4x256xf32>
    %585 = arith.mulf %583, %584 : vector<4x256xf32>
    %586 = arith.addf %579, %585 : vector<4x256xf32>
    %c30_237 = arith.constant 30 : index
    %c0_238 = arith.constant 0 : index
    %c0_239 = arith.constant 0 : index
    %587 = vector.load %arg5[%c30_237, %c0_238, %c0_239] : memref<36x4x1xf32, #tpu.memory_space<vmem>>, vector<1x4x1xf32>
    %588 = vector.shape_cast %587 : vector<1x4x1xf32> to vector<4x1xf32>
    %589 = vector.extract_strided_slice %572 {offsets = [2, 0], sizes = [1, 256], strides = [1, 1]} : vector<4x256xf32> to vector<1x256xf32>
    %590 = vector.broadcast %588 : vector<4x1xf32> to vector<4x256xf32>
    %591 = vector.broadcast %589 : vector<1x256xf32> to vector<4x256xf32>
    %592 = arith.mulf %590, %591 : vector<4x256xf32>
    %593 = arith.addf %586, %592 : vector<4x256xf32>
    %c31_240 = arith.constant 31 : index
    %c0_241 = arith.constant 0 : index
    %c0_242 = arith.constant 0 : index
    %594 = vector.load %arg5[%c31_240, %c0_241, %c0_242] : memref<36x4x1xf32, #tpu.memory_space<vmem>>, vector<1x4x1xf32>
    %595 = vector.shape_cast %594 : vector<1x4x1xf32> to vector<4x1xf32>
    %596 = vector.extract_strided_slice %572 {offsets = [3, 0], sizes = [1, 256], strides = [1, 1]} : vector<4x256xf32> to vector<1x256xf32>
    %597 = vector.broadcast %595 : vector<4x1xf32> to vector<4x256xf32>
    %598 = vector.broadcast %596 : vector<1x256xf32> to vector<4x256xf32>
    %599 = arith.mulf %597, %598 : vector<4x256xf32>
    %600 = arith.addf %593, %599 : vector<4x256xf32>
    %601 = vector.extract_strided_slice %319 {offsets = [0, 4], sizes = [4, 252], strides = [1, 1]} : vector<4x256xf32> to vector<4x252xf32>
    %cst_243 = arith.constant 0.000000e+00 : f32
    %602 = vector.broadcast %cst_243 : f32 to vector<4x4xf32>
    %603 = tpu.concatenate %601, %602 in 1 : vector<4x252xf32>, vector<4x4xf32> -> vector<4x256xf32>
    %c8_244 = arith.constant 8 : index
    %c0_245 = arith.constant 0 : index
    %c0_246 = arith.constant 0 : index
    %604 = vector.load %arg7[%c8_244, %c0_245, %c0_246] : memref<9x1x256xf32, #tpu.memory_space<vmem>>, vector<1x1x256xf32>
    %605 = vector.shape_cast %604 : vector<1x1x256xf32> to vector<1x256xf32>
    %606 = vector.broadcast %605 : vector<1x256xf32> to vector<4x256xf32>
    %607 = arith.mulf %603, %606 : vector<4x256xf32>
    %c32_247 = arith.constant 32 : index
    %c0_248 = arith.constant 0 : index
    %c0_249 = arith.constant 0 : index
    %608 = vector.load %arg5[%c32_247, %c0_248, %c0_249] : memref<36x4x1xf32, #tpu.memory_space<vmem>>, vector<1x4x1xf32>
    %609 = vector.shape_cast %608 : vector<1x4x1xf32> to vector<4x1xf32>
    %610 = vector.extract_strided_slice %607 {offsets = [0, 0], sizes = [1, 256], strides = [1, 1]} : vector<4x256xf32> to vector<1x256xf32>
    %611 = vector.broadcast %609 : vector<4x1xf32> to vector<4x256xf32>
    %612 = vector.broadcast %610 : vector<1x256xf32> to vector<4x256xf32>
    %613 = arith.mulf %611, %612 : vector<4x256xf32>
    %614 = arith.addf %600, %613 : vector<4x256xf32>
    %c33_250 = arith.constant 33 : index
    %c0_251 = arith.constant 0 : index
    %c0_252 = arith.constant 0 : index
    %615 = vector.load %arg5[%c33_250, %c0_251, %c0_252] : memref<36x4x1xf32, #tpu.memory_space<vmem>>, vector<1x4x1xf32>
    %616 = vector.shape_cast %615 : vector<1x4x1xf32> to vector<4x1xf32>
    %617 = vector.extract_strided_slice %607 {offsets = [1, 0], sizes = [1, 256], strides = [1, 1]} : vector<4x256xf32> to vector<1x256xf32>
    %618 = vector.broadcast %616 : vector<4x1xf32> to vector<4x256xf32>
    %619 = vector.broadcast %617 : vector<1x256xf32> to vector<4x256xf32>
    %620 = arith.mulf %618, %619 : vector<4x256xf32>
    %621 = arith.addf %614, %620 : vector<4x256xf32>
    %c34_253 = arith.constant 34 : index
    %c0_254 = arith.constant 0 : index
    %c0_255 = arith.constant 0 : index
    %622 = vector.load %arg5[%c34_253, %c0_254, %c0_255] : memref<36x4x1xf32, #tpu.memory_space<vmem>>, vector<1x4x1xf32>
    %623 = vector.shape_cast %622 : vector<1x4x1xf32> to vector<4x1xf32>
    %624 = vector.extract_strided_slice %607 {offsets = [2, 0], sizes = [1, 256], strides = [1, 1]} : vector<4x256xf32> to vector<1x256xf32>
    %625 = vector.broadcast %623 : vector<4x1xf32> to vector<4x256xf32>
    %626 = vector.broadcast %624 : vector<1x256xf32> to vector<4x256xf32>
    %627 = arith.mulf %625, %626 : vector<4x256xf32>
    %628 = arith.addf %621, %627 : vector<4x256xf32>
    %c35_256 = arith.constant 35 : index
    %c0_257 = arith.constant 0 : index
    %c0_258 = arith.constant 0 : index
    %629 = vector.load %arg5[%c35_256, %c0_257, %c0_258] : memref<36x4x1xf32, #tpu.memory_space<vmem>>, vector<1x4x1xf32>
    %630 = vector.shape_cast %629 : vector<1x4x1xf32> to vector<4x1xf32>
    %631 = vector.extract_strided_slice %607 {offsets = [3, 0], sizes = [1, 256], strides = [1, 1]} : vector<4x256xf32> to vector<1x256xf32>
    %632 = vector.broadcast %630 : vector<4x1xf32> to vector<4x256xf32>
    %633 = vector.broadcast %631 : vector<1x256xf32> to vector<4x256xf32>
    %634 = arith.mulf %632, %633 : vector<4x256xf32>
    %635 = arith.addf %628, %634 : vector<4x256xf32>
    %636 = arith.addf %635, %1 : vector<4x256xf32>
    %cst_259 = arith.constant 0.000000e+00 : f32
    %637 = vector.broadcast %cst_259 : f32 to vector<4x256xf32>
    %638 = arith.maximumf %636, %637 : vector<4x256xf32>
    %c0_260 = arith.constant 0 : index
    %c0_261 = arith.constant 0 : index
    %c0_262 = arith.constant 0 : index
    %639 = vector.load %arg8[%c0_260, %c0_261, %c0_262] : memref<1x4x256xf32, #tpu.memory_space<vmem>>, vector<1x4x256xf32>
    %640 = vector.shape_cast %639 : vector<1x4x256xf32> to vector<4x256xf32>
    %641 = vector.shape_cast %638 : vector<4x256xf32> to vector<1x4x256xf32>
    tpu.vector_store %arg8[%c0_260, %c0_261, %c0_262], %641 {strides = array<i32>} : memref<1x4x256xf32, #tpu.memory_space<vmem>>, vector<1x4x256xf32>,
    return
  }
  func.func @transform_0(%arg0: i32, %arg1: i32) -> (i32, i32, i32) {
    %c0_i32 = arith.constant 0 : i32
    %c0_i32_0 = arith.constant 0 : i32
    return %arg0, %c0_i32, %arg1 : i32, i32, i32
  }
  func.func @transform_1(%arg0: i32, %arg1: i32) -> (i32, i32, i32) {
    %c0_i32 = arith.constant 0 : i32
    %c0_i32_0 = arith.constant 0 : i32
    %c0_i32_1 = arith.constant 0 : i32
    %c0_i32_2 = arith.constant 0 : i32
    return %c0_i32, %c0_i32_0, %c0_i32_1 : i32, i32, i32
  }
  func.func @transform_2(%arg0: i32, %arg1: i32) -> (i32, i32) {
    %c0_i32 = arith.constant 0 : i32
    %c0_i32_0 = arith.constant 0 : i32
    %c0_i32_1 = arith.constant 0 : i32
    return %c0_i32, %c0_i32_0 : i32, i32
  }
  func.func @transform_3(%arg0: i32, %arg1: i32) -> (i32, i32, i32) {
    %c0_i32 = arith.constant 0 : i32
    %c0_i32_0 = arith.constant 0 : i32
    %c0_i32_1 = arith.constant 0 : i32
    %c0_i32_2 = arith.constant 0 : i32
    return %c0_i32, %c0_i32_0, %c0_i32_1 : i32, i32, i32
  }
  func.func @transform_4(%arg0: i32, %arg1: i32) -> (i32, i32) {
    %c0_i32 = arith.constant 0 : i32
    %c0_i32_0 = arith.constant 0 : i32
    %c0_i32_1 = arith.constant 0 : i32
    return %c0_i32, %c0_i32_0 : i32, i32
  }
  func.func @transform_5(%arg0: i32, %arg1: i32) -> (i32, i32, i32) {
    %c0_i32 = arith.constant 0 : i32
    %c0_i32_0 = arith.constant 0 : i32
    %c0_i32_1 = arith.constant 0 : i32
    %c0_i32_2 = arith.constant 0 : i32
    return %c0_i32, %c0_i32_0, %c0_i32_1 : i32, i32, i32
  }
  func.func @transform_6(%arg0: i32, %arg1: i32) -> (i32, i32, i32) {
    %c0_i32 = arith.constant 0 : i32
    %c0_i32_0 = arith.constant 0 : i32
    return %arg0, %c0_i32, %arg1 : i32, i32, i32
  }
}

</mosaic_0001>

<llo_original>
// kernel: speech_basic_block.1
$region0: #{speech_basic_block.1}
  #allocation0 [shape = 'u32[]', space=smem, size = 0x4, offset = 0x4, fixed_abs, tag = 'smem constant byte address 0x4 - core index']
  #allocation1 [shape = 'u32[144,128]{1,0:T(1,128)}', space=vmem, size = 0x12000, scoped, tag = 'internal scratch']
  %s0 = inlined_call_operand.vmem [shape: f32[2,4,256], index: 0, kind: input, shape index: {}]
  %s1 = inlined_call_operand.vmem [shape: f32[36,4,1], index: 1, kind: input, shape index: {}]
  %s2 = inlined_call_operand.vmem [shape: f32[4,1], index: 2, kind: input, shape index: {}]
  %s3 = inlined_call_operand.vmem [shape: f32[36,4,1], index: 3, kind: input, shape index: {}]
  %s4 = inlined_call_operand.vmem [shape: f32[4,1], index: 4, kind: input, shape index: {}]
  %s5 = inlined_call_operand.vmem [shape: f32[9,1,256], index: 5, kind: input, shape index: {}]
  %s6 = inlined_call_operand.vmem [shape: f32[2,4,256], index: 6, kind: output, shape index: {}]
  %s7 = sld [smem:[#allocation0]]
  $region57: #{speech_basic_block.1} parent=0
    _
  %s9 = ssub.s32 1, %s7
  %s10 = scalar_select 0, %s9, %s7
  loop: start=0, step=1, limit=4
  $region2: #{speech_basic_block.1} parent=0 // loop_pre_header
    _
  $region3: #{speech_basic_block.1} parent=0 // loop_header
    %s12 = sphi 0, %s16
    %p13 = scmp.ge.s32.totalorder %s12, 4
    %s19 = sphi 0, %s31
    %s20 = sphi 0, %s27
    %s21 = sphi 0, %s19
    %s22 = sphi 0, %s20
    %s23 = sphi 0, %s21
    %s24 = sphi 0, %s22
    %s36 = sphi 0, %s38
    %s39 = sphi 0, %s36
    %s40 = sphi 0, %s39
    %s56 = sphi 0, %s40
    %s60 = sphi 0, %s60
    %s62 = sphi 0, %s60
    %s63 = sphi 0, %s62
    %s77 = sphi 0, %s63
    %s81 = sphi 0, %s81
    %s83 = sphi 0, %s81
    %s84 = sphi 0, %s83
    %s98 = sphi 0, %s84
    %s102 = sphi 0, %s102
    %s104 = sphi 0, %s102
    %s105 = sphi 0, %s104
    %s119 = sphi 0, %s105
    %s123 = sphi 0, %s123
    %s125 = sphi 0, %s123
    %s126 = sphi 0, %s125
    %s140 = sphi 0, %s126
    %s144 = sphi 0, %s144
    %s146 = sphi 0, %s144
    %s147 = sphi 0, %s146
    %s161 = sphi 0, %s147
    %s169 = sphi 0, %s171
    %s172 = sphi 0, %s169
    %s173 = sphi 0, %s172
    %s189 = sphi 0, %s173
  $region4: #{speech_basic_block.1} parent=0 // loop_header_branch
    %15 = sbr.rel (%p13) target = $region8
  $region5: #{speech_basic_block.1} parent=0 // loop_body
    %s17 = ssub.s32 %s12, 1
    %s18 = ssub.s32 %s12, 2
    %s25 = sadd.s32 1, %s20
    %p26 = scmp.ge.s32.totalorder %s25, 1
    %s27 = scalar_select %p26, 0, %s25
    %s28 = sadd.s32 1, %s19
    %s29 = scalar_select %p26, %s28, %s19
    %p30 = scmp.ge.s32.totalorder %s29, 2
    %s31 = scalar_select %p30, 0, %s29
    %s32 = ssub.s32 %s19, %s31
    %s33 = ssub.s32 %s20, %s27
    %s34 = sor.u32 %s32, %s33
    %p35 = scmp.eq.s32.totalorder %s34, 0
    %s37 = sadd.s32 %s36, 1
    %s38 = scalar_select %p35, %s36, %s37
    %p41 = pneg %p35
    %p42 = scmp.eq.s32.totalorder %s12, 1
    %p43 = por %p41, %p42
    %p44 = scmp.ne.s32.totalorder %s36, %s39
    %p45 = scmp.eq.s32.totalorder %s12, 0
    %p46 = por %p44, %p45
    %p47 = scmp.ne.s32.totalorder %s36, %s39
    %p48 = scmp.eq.s32.totalorder %s17, 1
    %p49 = por %p47, %p48
    %p50 = scmp.ne.s32.totalorder %s39, %s40
    %p51 = scmp.eq.s32.totalorder %s17, 0
    %p52 = por %p50, %p51
    %p53 = scmp.ne.s32.totalorder %s39, %s40
    %p54 = scmp.eq.s32.totalorder %s18, 1
    %p55 = por %p53, %p54
    %p57 = scmp.ne.s32.totalorder %s40, %s56
    %p58 = scmp.eq.s32.totalorder %s18, 0
    %p59 = por %p57, %p58
    %s61 = sadd.s32 %s60, 1
    %p64 = scmp.eq.s32.totalorder %s12, 1
    %p65 = scmp.ne.s32.totalorder %s60, %s62
    %p66 = scmp.eq.s32.totalorder %s12, 0
    %p67 = por %p65, %p66
    %p68 = scmp.ne.s32.totalorder %s60, %s62
    %p69 = scmp.eq.s32.totalorder %s17, 1
    %p70 = por %p68, %p69
    %p71 = scmp.ne.s32.totalorder %s62, %s63
    %p72 = scmp.eq.s32.totalorder %s17, 0
    %p73 = por %p71, %p72
    %p74 = scmp.ne.s32.totalorder %s62, %s63
    %p75 = scmp.eq.s32.totalorder %s18, 1
    %p76 = por %p74, %p75
    %p78 = scmp.ne.s32.totalorder %s63, %s77
    %p79 = scmp.eq.s32.totalorder %s18, 0
    %p80 = por %p78, %p79
    %s82 = sadd.s32 %s81, 1
    %p85 = scmp.eq.s32.totalorder %s12, 1
    %p86 = scmp.ne.s32.totalorder %s81, %s83
    %p87 = scmp.eq.s32.totalorder %s12, 0
    %p88 = por %p86, %p87
    %p89 = scmp.ne.s32.totalorder %s81, %s83
    %p90 = scmp.eq.s32.totalorder %s17, 1
    %p91 = por %p89, %p90
    %p92 = scmp.ne.s32.totalorder %s83, %s84
    %p93 = scmp.eq.s32.totalorder %s17, 0
    %p94 = por %p92, %p93
    %p95 = scmp.ne.s32.totalorder %s83, %s84
    %p96 = scmp.eq.s32.totalorder %s18, 1
    %p97 = por %p95, %p96
    %p99 = scmp.ne.s32.totalorder %s84, %s98
    %p100 = scmp.eq.s32.totalorder %s18, 0
    %p101 = por %p99, %p100
    %s103 = sadd.s32 %s102, 1
    %p106 = scmp.eq.s32.totalorder %s12, 1
    %p107 = scmp.ne.s32.totalorder %s102, %s104
    %p108 = scmp.eq.s32.totalorder %s12, 0
    %p109 = por %p107, %p108
    %p110 = scmp.ne.s32.totalorder %s102, %s104
    %p111 = scmp.eq.s32.totalorder %s17, 1
    %p112 = por %p110, %p111
    %p113 = scmp.ne.s32.totalorder %s104, %s105
    %p114 = scmp.eq.s32.totalorder %s17, 0
    %p115 = por %p113, %p114
    %p116 = scmp.ne.s32.totalorder %s104, %s105
    %p117 = scmp.eq.s32.totalorder %s18, 1
    %p118 = por %p116, %p117
    %p120 = scmp.ne.s32.totalorder %s105, %s119
    %p121 = scmp.eq.s32.totalorder %s18, 0
    %p122 = por %p120, %p121
    %s124 = sadd.s32 %s123, 1
    %p127 = scmp.eq.s32.totalorder %s12, 1
    %p128 = scmp.ne.s32.totalorder %s123, %s125
    %p129 = scmp.eq.s32.totalorder %s12, 0
    %p130 = por %p128, %p129
    %p131 = scmp.ne.s32.totalorder %s123, %s125
    %p132 = scmp.eq.s32.totalorder %s17, 1
    %p133 = por %p131, %p132
    %p134 = scmp.ne.s32.totalorder %s125, %s126
    %p135 = scmp.eq.s32.totalorder %s17, 0
    %p136 = por %p134, %p135
    %p137 = scmp.ne.s32.totalorder %s125, %s126
    %p138 = scmp.eq.s32.totalorder %s18, 1
    %p139 = por %p137, %p138
    %p141 = scmp.ne.s32.totalorder %s126, %s140
    %p142 = scmp.eq.s32.totalorder %s18, 0
    %p143 = por %p141, %p142
    %s145 = sadd.s32 %s144, 1
    %p148 = scmp.eq.s32.totalorder %s12, 1
    %p149 = scmp.ne.s32.totalorder %s144, %s146
    %p150 = scmp.eq.s32.totalorder %s12, 0
    %p151 = por %p149, %p150
    %p152 = scmp.ne.s32.totalorder %s144, %s146
    %p153 = scmp.eq.s32.totalorder %s17, 1
    %p154 = por %p152, %p153
    %p155 = scmp.ne.s32.totalorder %s146, %s147
    %p156 = scmp.eq.s32.totalorder %s17, 0
    %p157 = por %p155, %p156
    %p158 = scmp.ne.s32.totalorder %s146, %s147
    %p159 = scmp.eq.s32.totalorder %s18, 1
    %p160 = por %p158, %p159
    %p162 = scmp.ne.s32.totalorder %s147, %s161
    %p163 = scmp.eq.s32.totalorder %s18, 0
    %p164 = por %p162, %p163
    %s165 = ssub.s32 %s19, %s31
    %s166 = ssub.s32 %s20, %s27
    %s167 = sor.u32 %s165, %s166
    %p168 = scmp.eq.s32.totalorder %s167, 0
    %s170 = sadd.s32 %s169, 1
    %s171 = scalar_select %p168, %s169, %s170
    %p174 = pneg %p168
    %p175 = scmp.eq.s32.totalorder %s12, 1
    %p176 = por %p174, %p175
    %p177 = scmp.ne.s32.totalorder %s169, %s172
    %p178 = scmp.eq.s32.totalorder %s12, 0
    %p179 = por %p177, %p178
    %p180 = scmp.ne.s32.totalorder %s169, %s172
    %p181 = scmp.eq.s32.totalorder %s17, 1
    %p182 = por %p180, %p181
    %p183 = scmp.ne.s32.totalorder %s172, %s173
    %p184 = scmp.eq.s32.totalorder %s17, 0
    %p185 = por %p183, %p184
    %p186 = scmp.ne.s32.totalorder %s172, %s173
    %p187 = scmp.eq.s32.totalorder %s18, 1
    %p188 = por %p186, %p187
    %p190 = scmp.ne.s32.totalorder %s173, %s189
    %p191 = scmp.eq.s32.totalorder %s18, 0
    %p192 = por %p190, %p191
    %p193 = scmp.le.s32.totalorder 1, %s12
    %p194 = scmp.lt.s32.totalorder %s12, 3
    %p195 = pnand %p193, %p194
    %p196 = pneg %p195
    // Predicated region
    $region9: #{speech_basic_block.1} parent=5 // pred_check
      _
    $region10: #{speech_basic_block.1} parent=5 // pred_check_branch
      %198 = sbr.rel (%p195) target = $region12
    $region11: #{speech_basic_block.1} parent=5 // pred_region
      %s199 = ssub.s32 %s12, 1
      // Predicated region
      $region13: #{speech_basic_block.1} parent=11 // pred_check
        %p200 = pneg %p73
      $region14: #{speech_basic_block.1} parent=11 // pred_check_branch
        %202 = sbr.rel (%p200) target = $region16
      $region15: #{speech_basic_block.1} parent=11 // pred_region
        _
      $region16: #{speech_basic_block.1} parent=11 // pred_fallthru
        _
      // Predicated region
      $region17: #{speech_basic_block.1} parent=11 // pred_check
        %p203 = pneg %p94
      $region18: #{speech_basic_block.1} parent=11 // pred_check_branch
        %205 = sbr.rel (%p203) target = $region20
      $region19: #{speech_basic_block.1} parent=11 // pred_region
        _
      $region20: #{speech_basic_block.1} parent=11 // pred_fallthru
        _
      // Predicated region
      $region21: #{speech_basic_block.1} parent=11 // pred_check
        %p206 = pneg %p115
      $region22: #{speech_basic_block.1} parent=11 // pred_check_branch
        %208 = sbr.rel (%p206) target = $region24
      $region23: #{speech_basic_block.1} parent=11 // pred_region
        _
      $region24: #{speech_basic_block.1} parent=11 // pred_fallthru
        _
      // Predicated region
      $region25: #{speech_basic_block.1} parent=11 // pred_check
        %p209 = pneg %p136
      $region26: #{speech_basic_block.1} parent=11 // pred_check_branch
        %211 = sbr.rel (%p209) target = $region28
      $region27: #{speech_basic_block.1} parent=11 // pred_region
        _
      $region28: #{speech_basic_block.1} parent=11 // pred_fallthru
        _
      // Predicated region
      $region29: #{speech_basic_block.1} parent=11 // pred_check
        %p212 = pneg %p157
      $region30: #{speech_basic_block.1} parent=11 // pred_check_branch
        %214 = sbr.rel (%p212) target = $region32
      $region31: #{speech_basic_block.1} parent=11 // pred_region
        _
      $region32: #{speech_basic_block.1} parent=11 // pred_fallthru
        _
    $region12: #{speech_basic_block.1} parent=5 // pred_fallthru
      _
    %p215 = scmp.lt.s32.totalorder %s12, 2
    // Predicated region
    $region33: #{speech_basic_block.1} parent=5 // pred_check
      %p216 = pneg %p215
    $region34: #{speech_basic_block.1} parent=5 // pred_check_branch
      %218 = sbr.rel (%p216) target = $region36
    $region35: #{speech_basic_block.1} parent=5 // pred_region
      // Predicated region
      $region37: #{speech_basic_block.1} parent=35 // pred_check
        %p219 = pneg %p46
      $region38: #{speech_basic_block.1} parent=35 // pred_check_branch
        %221 = sbr.rel (%p219) target = $region40
      $region39: #{speech_basic_block.1} parent=35 // pred_region
        %s222 = smul.u32 2, %s20
        %p223 = scmp.lt.s32.totalorder %s19, 1
        %s224 = scalar_select %p223, %s19, 1
        %p225 = scmp.lt.s32.totalorder %s222, 1
        %s226 = scalar_select %p225, %s222, 1
        %s227 = smul.addr %s224, 2
        %s228 = sadd.s32 %s226, %s227
        %s229 = smul.addr %s228, 4
        %s230 = scalar_lea.vmem %s0, %s229
        %s231 = smul.u32 2, %s20
      $region40: #{speech_basic_block.1} parent=35 // pred_fallthru
        _
    $region36: #{speech_basic_block.1} parent=5 // pred_fallthru
      _
    %p232 = scmp.le.s32.totalorder 1, %s12
    %p233 = scmp.lt.s32.totalorder %s12, 3
    %p234 = pnand %p232, %p233
    %p235 = pneg %p234
    // Predicated region
    $region41: #{speech_basic_block.1} parent=5 // pred_check
      _
    $region42: #{speech_basic_block.1} parent=5 // pred_check_branch
      %237 = sbr.rel (%p234) target = $region44
    $region43: #{speech_basic_block.1} parent=5 // pred_region
      %s238 = ssub.s32 %s12, 1
      %s239 = smul.u32 2, %s22
      %p240 = scmp.lt.s32.totalorder %s21, 1
      %s241 = scalar_select %p240, %s21, 1
      %p242 = scmp.lt.s32.totalorder %s239, 1
      %s243 = scalar_select %p242, %s239, 1
      %s244 = smul.addr %s241, 2
      %s245 = sadd.s32 %s243, %s244
      %s246 = smul.addr %s245, 4
      %s247 = scalar_lea.vmem %s0, %s246
      %p248 = pneg %p52
      %p249 = pneg %p49
      %p250 = pneg %p73
      %p251 = pneg %p70
      %p252 = pneg %p94
      %p253 = pneg %p91
      %p254 = pneg %p115
      %p255 = pneg %p112
      %p256 = pneg %p136
      %p257 = pneg %p133
      %p258 = pneg %p157
      %p259 = pneg %p154
      %p260 = pneg %p185
      %p261 = pneg %p182
      %s262 = smul.u32 2, %s22
      %p263 = scmp.lt.s32.totalorder %s21, 1
      %s264 = scalar_select %p263, %s21, 1
      %p265 = scmp.lt.s32.totalorder %s262, 1
      %s266 = scalar_select %p265, %s262, 1
      %s267 = smul.addr %s264, 2
      %s268 = sadd.s32 %s266, %s267
      %s269 = smul.addr %s268, 4
      %s270 = scalar_lea.vmem %s6, %s269
      %s271 = smul.u32 2, %s22
      %p272 = scmp.lt.s32.totalorder %s21, 1
      %s273 = scalar_select %p272, %s21, 1
      %p274 = scmp.lt.s32.totalorder %s271, 1
      %s275 = scalar_select %p274, %s271, 1
      %s276 = smul.addr %s273, 2
      %s277 = sadd.s32 %s275, %s276
      %s278 = smul.addr %s277, 4
      %s279 = scalar_lea.vmem %s0, %s278
      %s280 = smul.u32 2, %s22
      %s281 = smul.u32 2, %s22
      %p282 = scmp.lt.s32.totalorder %s21, 1
      %s283 = scalar_select %p282, %s21, 1
      %p284 = scmp.lt.s32.totalorder %s281, 1
      %s285 = scalar_select %p284, %s281, 1
      %s286 = smul.addr %s283, 2
      %s287 = sadd.s32 %s285, %s286
      %s288 = smul.addr %s287, 4
      %s289 = scalar_lea.vmem %s6, %s288
      %s290 = smul.u32 2, %s22
      %v291 = vld [vmem:[%s279] sm:$0xff]
      %v292 = vld [vmem:[%s2] sm:$0xf]
      %294 = vset.pattern.permute.xlu0 0
      %295 = vperm.xlu0 %294, %v292
      %v296 = vpop.permute.xlu0 %295
      %v298 = vadd.f32 %v296, 0.0
      %v300 = vcombine.high %v291, %v291
      %301 = vrot.lane.b32.xlu0 %v291, 4
      %v302 = vpop.permute.xlu0 %301
      %303 = vrot.lane.b32.xlu0 %v300, 4
      %v304 = vpop.permute.xlu0 %303
      %vm305 = vcmask 31744
      %v306 = vsel %vm305, %v302, %v304
      %v309 = vsel %vm305, 0.0, %v302
      %v310 = vld [vmem:[%s5] sm:$0x3]
      %v312 = vlaneseq
      %v313 = vshrl.u32 %v312, 7
      %v314 = vsub.s32 0, %v313
      %v315 = vrot.slane %v310, %v314
      %v316 = vlaneseq
      %v317 = vshrl.u32 %v316, 7
      %v318 = vsub.s32 1, %v317
      %v319 = vrot.slane %v310, %v318
      %v322 = vmul.f32 %v309, %v315
      %v323 = vmul.f32 %v306, %v319
      %v324 = vld [vmem:[%s1] sm:$0xf]
      %326 = vset.pattern.permute.xlu0 0
      %327 = vperm.xlu0 %326, %v324
      %v328 = vpop.permute.xlu0 %327
      %v330 = vlaneseq
      %v331 = vshrl.u32 %v330, 7
      %v332 = vsub.s32 0, %v331
      %v333 = vrot.slane %v322, %v332
      %v334 = vlaneseq
      %v335 = vshrl.u32 %v334, 7
      %v336 = vsub.s32 0, %v335
      %v337 = vrot.slane %v323, %v336
      %v338 = vmul.f32 %v328, %v333
      %v339 = vmul.f32 %v328, %v337
      %v340 = vadd.f32 %v298, %v338
      %v341 = vadd.f32 %v298, %v339
      %s342 = scalar_lea.vmem %s1, 4
      %v343 = vld [vmem:[%s342] sm:$0xf]
      %345 = vset.pattern.permute.xlu0 0
      %346 = vperm.xlu0 %345, %v343
      %v347 = vpop.permute.xlu0 %346
      %v349 = vlaneseq
      %v350 = vshrl.u32 %v349, 7
      %v351 = vsub.s32 1, %v350
      %v352 = vrot.slane %v322, %v351
      %v353 = vlaneseq
      %v354 = vshrl.u32 %v353, 7
      %v355 = vsub.s32 1, %v354
      %v356 = vrot.slane %v323, %v355
      %v357 = vmul.f32 %v347, %v352
      %v358 = vmul.f32 %v347, %v356
      %v359 = vadd.f32 %v340, %v357
      %v360 = vadd.f32 %v341, %v358
      %s361 = scalar_lea.vmem %s1, 8
      %v362 = vld [vmem:[%s361] sm:$0xf]
      %364 = vset.pattern.permute.xlu0 0
      %365 = vperm.xlu0 %364, %v362
      %v366 = vpop.permute.xlu0 %365
      %v368 = vlaneseq
      %v369 = vshrl.u32 %v368, 7
      %v370 = vsub.s32 2, %v369
      %v371 = vrot.slane %v322, %v370
      %v372 = vlaneseq
      %v373 = vshrl.u32 %v372, 7
      %v374 = vsub.s32 2, %v373
      %v375 = vrot.slane %v323, %v374
      %v376 = vmul.f32 %v366, %v371
      %v377 = vmul.f32 %v366, %v375
      %v378 = vadd.f32 %v359, %v376
      %v379 = vadd.f32 %v360, %v377
      %s380 = scalar_lea.vmem %s1, 12
      %v381 = vld [vmem:[%s380] sm:$0xf]
      %383 = vset.pattern.permute.xlu0 0
      %384 = vperm.xlu0 %383, %v381
      %v385 = vpop.permute.xlu0 %384
      %v387 = vlaneseq
      %v388 = vshrl.u32 %v387, 7
      %v389 = vsub.s32 3, %v388
      %v390 = vrot.slane %v322, %v389
      %v391 = vlaneseq
      %v392 = vshrl.u32 %v391, 7
      %v393 = vsub.s32 3, %v392
      %v394 = vrot.slane %v323, %v393
      %v395 = vmul.f32 %v385, %v390
      %v396 = vmul.f32 %v385, %v394
      %v397 = vadd.f32 %v378, %v395
      %v398 = vadd.f32 %v379, %v396
      %399 = vrot.lane.b32.xlu0 %v291, 3
      %v400 = vpop.permute.xlu0 %399
      %401 = vrot.lane.b32.xlu0 %v300, 3
      %v402 = vpop.permute.xlu0 %401
      %vm403 = vcmask 23552
      %v404 = vsel %vm403, %v400, %v402
      %v407 = vsel %vm403, 0.0, %v400
      %s408 = scalar_lea.vmem %s5, 2
      %v409 = vld [vmem:[%s408] sm:$0x3]
      %v411 = vlaneseq
      %v412 = vshrl.u32 %v411, 7
      %v413 = vsub.s32 0, %v412
      %v414 = vrot.slane %v409, %v413
      %v415 = vlaneseq
      %v416 = vshrl.u32 %v415, 7
      %v417 = vsub.s32 1, %v416
      %v418 = vrot.slane %v409, %v417
      %v421 = vmul.f32 %v407, %v414
      %v422 = vmul.f32 %v404, %v418
      %s423 = scalar_lea.vmem %s1, 16
      %v424 = vld [vmem:[%s423] sm:$0xf]
      %426 = vset.pattern.permute.xlu0 0
      %427 = vperm.xlu0 %426, %v424
      %v428 = vpop.permute.xlu0 %427
      %v430 = vlaneseq
      %v431 = vshrl.u32 %v430, 7
      %v432 = vsub.s32 0, %v431
      %v433 = vrot.slane %v421, %v432
      %v434 = vlaneseq
      %v435 = vshrl.u32 %v434, 7
      %v436 = vsub.s32 0, %v435
      %v437 = vrot.slane %v422, %v436
      %v438 = vmul.f32 %v428, %v433
      %v439 = vmul.f32 %v428, %v437
      %v440 = vadd.f32 %v397, %v438
      %v441 = vadd.f32 %v398, %v439
      %s442 = scalar_lea.vmem %s1, 20
      %v443 = vld [vmem:[%s442] sm:$0xf]
      %445 = vset.pattern.permute.xlu0 0
      %446 = vperm.xlu0 %445, %v443
      %v447 = vpop.permute.xlu0 %446
      %v449 = vlaneseq
      %v450 = vshrl.u32 %v449, 7
      %v451 = vsub.s32 1, %v450
      %v452 = vrot.slane %v421, %v451
      %v453 = vlaneseq
      %v454 = vshrl.u32 %v453, 7
      %v455 = vsub.s32 1, %v454
      %v456 = vrot.slane %v422, %v455
      %v457 = vmul.f32 %v447, %v452
      %v458 = vmul.f32 %v447, %v456
      %v459 = vadd.f32 %v440, %v457
      %v460 = vadd.f32 %v441, %v458
      %s461 = scalar_lea.vmem %s1, 24
      %v462 = vld [vmem:[%s461] sm:$0xf]
      %464 = vset.pattern.permute.xlu0 0
      %465 = vperm.xlu0 %464, %v462
      %v466 = vpop.permute.xlu0 %465
      %v468 = vlaneseq
      %v469 = vshrl.u32 %v468, 7
      %v470 = vsub.s32 2, %v469
      %v471 = vrot.slane %v421, %v470
      %v472 = vlaneseq
      %v473 = vshrl.u32 %v472, 7
      %v474 = vsub.s32 2, %v473
      %v475 = vrot.slane %v422, %v474
      %v476 = vmul.f32 %v466, %v471
      %v477 = vmul.f32 %v466, %v475
      %v478 = vadd.f32 %v459, %v476
      %v479 = vadd.f32 %v460, %v477
      %s480 = scalar_lea.vmem %s1, 28
      %v481 = vld [vmem:[%s480] sm:$0xf]
      %483 = vset.pattern.permute.xlu0 0
      %484 = vperm.xlu0 %483, %v481
      %v485 = vpop.permute.xlu0 %484
      %v487 = vlaneseq
      %v488 = vshrl.u32 %v487, 7
      %v489 = vsub.s32 3, %v488
      %v490 = vrot.slane %v421, %v489
      %v491 = vlaneseq
      %v492 = vshrl.u32 %v491, 7
      %v493 = vsub.s32 3, %v492
      %v494 = vrot.slane %v422, %v493
      %v495 = vmul.f32 %v485, %v490
      %v496 = vmul.f32 %v485, %v494
      %v497 = vadd.f32 %v478, %v495
      %v498 = vadd.f32 %v479, %v496
      %499 = vrot.lane.b32.xlu0 %v291, 2
      %v500 = vpop.permute.xlu0 %499
      %501 = vrot.lane.b32.xlu0 %v300, 2
      %v502 = vpop.permute.xlu0 %501
      %vm503 = vcmask 15360
      %v504 = vsel %vm503, %v500, %v502
      %v507 = vsel %vm503, 0.0, %v500
      %s508 = scalar_lea.vmem %s5, 4
      %v509 = vld [vmem:[%s508] sm:$0x3]
      %v511 = vlaneseq
      %v512 = vshrl.u32 %v511, 7
      %v513 = vsub.s32 0, %v512
      %v514 = vrot.slane %v509, %v513
      %v515 = vlaneseq
      %v516 = vshrl.u32 %v515, 7
      %v517 = vsub.s32 1, %v516
      %v518 = vrot.slane %v509, %v517
      %v521 = vmul.f32 %v507, %v514
      %v522 = vmul.f32 %v504, %v518
      %s523 = scalar_lea.vmem %s1, 32
      %v524 = vld [vmem:[%s523] sm:$0xf]
      %526 = vset.pattern.permute.xlu0 0
      %527 = vperm.xlu0 %526, %v524
      %v528 = vpop.permute.xlu0 %527
      %v530 = vlaneseq
      %v531 = vshrl.u32 %v530, 7
      %v532 = vsub.s32 0, %v531
      %v533 = vrot.slane %v521, %v532
      %v534 = vlaneseq
      %v535 = vshrl.u32 %v534, 7
      %v536 = vsub.s32 0, %v535
      %v537 = vrot.slane %v522, %v536
      %v538 = vmul.f32 %v528, %v533
      %v539 = vmul.f32 %v528, %v537
      %v540 = vadd.f32 %v497, %v538
      %v541 = vadd.f32 %v498, %v539
      %s542 = scalar_lea.vmem %s1, 36
      %v543 = vld [vmem:[%s542] sm:$0xf]
      %545 = vset.pattern.permute.xlu0 0
      %546 = vperm.xlu0 %545, %v543
      %v547 = vpop.permute.xlu0 %546
      %v549 = vlaneseq
      %v550 = vshrl.u32 %v549, 7
      %v551 = vsub.s32 1, %v550
      %v552 = vrot.slane %v521, %v551
      %v553 = vlaneseq
      %v554 = vshrl.u32 %v553, 7
      %v555 = vsub.s32 1, %v554
      %v556 = vrot.slane %v522, %v555
      %v557 = vmul.f32 %v547, %v552
      %v558 = vmul.f32 %v547, %v556
      %v559 = vadd.f32 %v540, %v557
      %v560 = vadd.f32 %v541, %v558
      %s561 = scalar_lea.vmem %s1, 40
      %v562 = vld [vmem:[%s561] sm:$0xf]
      %564 = vset.pattern.permute.xlu0 0
      %565 = vperm.xlu0 %564, %v562
      %v566 = vpop.permute.xlu0 %565
      %v568 = vlaneseq
      %v569 = vshrl.u32 %v568, 7
      %v570 = vsub.s32 2, %v569
      %v571 = vrot.slane %v521, %v570
      %v572 = vlaneseq
      %v573 = vshrl.u32 %v572, 7
      %v574 = vsub.s32 2, %v573
      %v575 = vrot.slane %v522, %v574
      %v576 = vmul.f32 %v566, %v571
      %v577 = vmul.f32 %v566, %v575
      %v578 = vadd.f32 %v559, %v576
      %v579 = vadd.f32 %v560, %v577
      %s580 = scalar_lea.vmem %s1, 44
      %v581 = vld [vmem:[%s580] sm:$0xf]
      %583 = vset.pattern.permute.xlu0 0
      %584 = vperm.xlu0 %583, %v581
      %v585 = vpop.permute.xlu0 %584
      %v587 = vlaneseq
      %v588 = vshrl.u32 %v587, 7
      %v589 = vsub.s32 3, %v588
      %v590 = vrot.slane %v521, %v589
      %v591 = vlaneseq
      %v592 = vshrl.u32 %v591, 7
      %v593 = vsub.s32 3, %v592
      %v594 = vrot.slane %v522, %v593
      %v595 = vmul.f32 %v585, %v590
      %v596 = vmul.f32 %v585, %v594
      %v597 = vadd.f32 %v578, %v595
      %v598 = vadd.f32 %v579, %v596
      %599 = vrot.lane.b32.xlu0 %v291, 1
      %v600 = vpop.permute.xlu0 %599
      %601 = vrot.lane.b32.xlu0 %v300, 1
      %v602 = vpop.permute.xlu0 %601
      %vm603 = vcmask 7168
      %v604 = vsel %vm603, %v600, %v602
      %v607 = vsel %vm603, 0.0, %v600
      %s608 = scalar_lea.vmem %s5, 6
      %v609 = vld [vmem:[%s608] sm:$0x3]
      %v611 = vlaneseq
      %v612 = vshrl.u32 %v611, 7
      %v613 = vsub.s32 0, %v612
      %v614 = vrot.slane %v609, %v613
      %v615 = vlaneseq
      %v616 = vshrl.u32 %v615, 7
      %v617 = vsub.s32 1, %v616
      %v618 = vrot.slane %v609, %v617
      %v621 = vmul.f32 %v607, %v614
      %v622 = vmul.f32 %v604, %v618
      %s623 = scalar_lea.vmem %s1, 48
      %v624 = vld [vmem:[%s623] sm:$0xf]
      %626 = vset.pattern.permute.xlu0 0
      %627 = vperm.xlu0 %626, %v624
      %v628 = vpop.permute.xlu0 %627
      %v630 = vlaneseq
      %v631 = vshrl.u32 %v630, 7
      %v632 = vsub.s32 0, %v631
      %v633 = vrot.slane %v621, %v632
      %v634 = vlaneseq
      %v635 = vshrl.u32 %v634, 7
      %v636 = vsub.s32 0, %v635
      %v637 = vrot.slane %v622, %v636
      %v638 = vmul.f32 %v628, %v633
      %v639 = vmul.f32 %v628, %v637
      %v640 = vadd.f32 %v597, %v638
      %v641 = vadd.f32 %v598, %v639
      %s642 = scalar_lea.vmem %s1, 52
      %v643 = vld [vmem:[%s642] sm:$0xf]
      %645 = vset.pattern.permute.xlu0 0
      %646 = vperm.xlu0 %645, %v643
      %v647 = vpop.permute.xlu0 %646
      %v649 = vlaneseq
      %v650 = vshrl.u32 %v649, 7
      %v651 = vsub.s32 1, %v650
      %v652 = vrot.slane %v621, %v651
      %v653 = vlaneseq
      %v654 = vshrl.u32 %v653, 7
      %v655 = vsub.s32 1, %v654
      %v656 = vrot.slane %v622, %v655
      %v657 = vmul.f32 %v647, %v652
      %v658 = vmul.f32 %v647, %v656
      %v659 = vadd.f32 %v640, %v657
      %v660 = vadd.f32 %v641, %v658
      %s661 = scalar_lea.vmem %s1, 56
      %v662 = vld [vmem:[%s661] sm:$0xf]
      %664 = vset.pattern.permute.xlu0 0
      %665 = vperm.xlu0 %664, %v662
      %v666 = vpop.permute.xlu0 %665
      %v668 = vlaneseq
      %v669 = vshrl.u32 %v668, 7
      %v670 = vsub.s32 2, %v669
      %v671 = vrot.slane %v621, %v670
      %v672 = vlaneseq
      %v673 = vshrl.u32 %v672, 7
      %v674 = vsub.s32 2, %v673
      %v675 = vrot.slane %v622, %v674
      %v676 = vmul.f32 %v666, %v671
      %v677 = vmul.f32 %v666, %v675
      %v678 = vadd.f32 %v659, %v676
      %v679 = vadd.f32 %v660, %v677
      %s680 = scalar_lea.vmem %s1, 60
      %v681 = vld [vmem:[%s680] sm:$0xf]
      %683 = vset.pattern.permute.xlu0 0
      %684 = vperm.xlu0 %683, %v681
      %v685 = vpop.permute.xlu0 %684
      %v687 = vlaneseq
      %v688 = vshrl.u32 %v687, 7
      %v689 = vsub.s32 3, %v688
      %v690 = vrot.slane %v621, %v689
      %v691 = vlaneseq
      %v692 = vshrl.u32 %v691, 7
      %v693 = vsub.s32 3, %v692
      %v694 = vrot.slane %v622, %v693
      %v695 = vmul.f32 %v685, %v690
      %v696 = vmul.f32 %v685, %v694
      %v697 = vadd.f32 %v678, %v695
      %v698 = vadd.f32 %v679, %v696
      %s699 = scalar_lea.vmem %s5, 8
      %v700 = vld [vmem:[%s699] sm:$0x3]
      %v702 = vlaneseq
      %v703 = vshrl.u32 %v702, 7
      %v704 = vsub.s32 0, %v703
      %v705 = vrot.slane %v700, %v704
      %v706 = vlaneseq
      %v707 = vshrl.u32 %v706, 7
      %v708 = vsub.s32 1, %v707
      %v709 = vrot.slane %v700, %v708
      %v712 = vcombine.low %v705, %v709
      %v714 = vmul.f32 %v291, %v712
      %s715 = scalar_lea.vmem %s1, 64
      %v716 = vld [vmem:[%s715] sm:$0xf]
      %718 = vset.pattern.permute.xlu0 0
      %719 = vperm.xlu0 %718, %v716
      %v720 = vpop.permute.xlu0 %719
      %v723 = vlaneseq
      %v724 = vshrl.u32 %v723, 7
      %v725 = vsub.s32 0, %v724
      %v726 = vrot.slane %v714, %v725
      %v727 = vlaneseq
      %v728 = vshrl.u32 %v727, 7
      %v729 = vsub.s32 4, %v728
      %v730 = vrot.slane %v714, %v729
      %v733 = vlaneseq
      %v734 = vshrl.u32 %v733, 7
      %v735 = vsub.s32 0, %v734
      %v736 = vrot.slane %v726, %v735
      %v737 = vlaneseq
      %v738 = vshrl.u32 %v737, 7
      %v739 = vsub.s32 0, %v738
      %v740 = vrot.slane %v730, %v739
      %v741 = vmul.f32 %v720, %v736
      %v742 = vmul.f32 %v720, %v740
      %v743 = vadd.f32 %v697, %v741
      %v744 = vadd.f32 %v698, %v742
      %s745 = scalar_lea.vmem %s1, 68
      %v746 = vld [vmem:[%s745] sm:$0xf]
      %748 = vset.pattern.permute.xlu0 0
      %749 = vperm.xlu0 %748, %v746
      %v750 = vpop.permute.xlu0 %749
      %v752 = vlaneseq
      %v753 = vshrl.u32 %v752, 7
      %v754 = vsub.s32 1, %v753
      %v755 = vrot.slane %v714, %v754
      %v756 = vlaneseq
      %v757 = vshrl.u32 %v756, 7
      %v758 = vsub.s32 5, %v757
      %v759 = vrot.slane %v714, %v758
      %v762 = vlaneseq
      %v763 = vshrl.u32 %v762, 7
      %v764 = vsub.s32 1, %v763
      %v765 = vrot.slane %v755, %v764
      %v766 = vlaneseq
      %v767 = vshrl.u32 %v766, 7
      %v768 = vsub.s32 1, %v767
      %v769 = vrot.slane %v759, %v768
      %v770 = vmul.f32 %v750, %v765
      %v771 = vmul.f32 %v750, %v769
      %v772 = vadd.f32 %v743, %v770
      %v773 = vadd.f32 %v744, %v771
      %s774 = scalar_lea.vmem %s1, 72
      %v775 = vld [vmem:[%s774] sm:$0xf]
      %777 = vset.pattern.permute.xlu0 0
      %778 = vperm.xlu0 %777, %v775
      %v779 = vpop.permute.xlu0 %778
      %v781 = vlaneseq
      %v782 = vshrl.u32 %v781, 7
      %v783 = vsub.s32 2, %v782
      %v784 = vrot.slane %v714, %v783
      %v785 = vlaneseq
      %v786 = vshrl.u32 %v785, 7
      %v787 = vsub.s32 6, %v786
      %v788 = vrot.slane %v714, %v787
      %v791 = vlaneseq
      %v792 = vshrl.u32 %v791, 7
      %v793 = vsub.s32 2, %v792
      %v794 = vrot.slane %v784, %v793
      %v795 = vlaneseq
      %v796 = vshrl.u32 %v795, 7
      %v797 = vsub.s32 2, %v796
      %v798 = vrot.slane %v788, %v797
      %v799 = vmul.f32 %v779, %v794
      %v800 = vmul.f32 %v779, %v798
      %v801 = vadd.f32 %v772, %v799
      %v802 = vadd.f32 %v773, %v800
      %s803 = scalar_lea.vmem %s1, 76
      %v804 = vld [vmem:[%s803] sm:$0xf]
      %806 = vset.pattern.permute.xlu0 0
      %807 = vperm.xlu0 %806, %v804
      %v808 = vpop.permute.xlu0 %807
      %v810 = vlaneseq
      %v811 = vshrl.u32 %v810, 7
      %v812 = vsub.s32 3, %v811
      %v813 = vrot.slane %v714, %v812
      %v814 = vlaneseq
      %v815 = vshrl.u32 %v814, 7
      %v816 = vsub.s32 7, %v815
      %v817 = vrot.slane %v714, %v816
      %v820 = vlaneseq
      %v821 = vshrl.u32 %v820, 7
      %v822 = vsub.s32 3, %v821
      %v823 = vrot.slane %v813, %v822
      %v824 = vlaneseq
      %v825 = vshrl.u32 %v824, 7
      %v826 = vsub.s32 3, %v825
      %v827 = vrot.slane %v817, %v826
      %v828 = vmul.f32 %v808, %v823
      %v829 = vmul.f32 %v808, %v827
      %v830 = vadd.f32 %v801, %v828
      %v831 = vadd.f32 %v802, %v829
      %832 = vrot.lane.b32.xlu0 %v291, 127
      %v833 = vpop.permute.xlu0 %832
      %834 = vrot.lane.b32.xlu0 %v300, 127
      %v835 = vpop.permute.xlu0 %834
      %vm836 = vcmask 1039360
      %v837 = vsel %vm836, %v833, %v835
      %v840 = vsel %vm836, %v835, 0.0
      %s841 = scalar_lea.vmem %s5, 10
      %v842 = vld [vmem:[%s841] sm:$0x3]
      %v844 = vlaneseq
      %v845 = vshrl.u32 %v844, 7
      %v846 = vsub.s32 0, %v845
      %v847 = vrot.slane %v842, %v846
      %v848 = vlaneseq
      %v849 = vshrl.u32 %v848, 7
      %v850 = vsub.s32 1, %v849
      %v851 = vrot.slane %v842, %v850
      %v854 = vmul.f32 %v837, %v847
      %v855 = vmul.f32 %v840, %v851
      %s856 = scalar_lea.vmem %s1, 80
      %v857 = vld [vmem:[%s856] sm:$0xf]
      %859 = vset.pattern.permute.xlu0 0
      %860 = vperm.xlu0 %859, %v857
      %v861 = vpop.permute.xlu0 %860
      %v863 = vlaneseq
      %v864 = vshrl.u32 %v863, 7
      %v865 = vsub.s32 0, %v864
      %v866 = vrot.slane %v854, %v865
      %v867 = vlaneseq
      %v868 = vshrl.u32 %v867, 7
      %v869 = vsub.s32 0, %v868
      %v870 = vrot.slane %v855, %v869
      %v871 = vmul.f32 %v861, %v866
      %v872 = vmul.f32 %v861, %v870
      %v873 = vadd.f32 %v830, %v871
      %v874 = vadd.f32 %v831, %v872
      %s875 = scalar_lea.vmem %s1, 84
      %v876 = vld [vmem:[%s875] sm:$0xf]
      %878 = vset.pattern.permute.xlu0 0
      %879 = vperm.xlu0 %878, %v876
      %v880 = vpop.permute.xlu0 %879
      %v882 = vlaneseq
      %v883 = vshrl.u32 %v882, 7
      %v884 = vsub.s32 1, %v883
      %v885 = vrot.slane %v854, %v884
      %v886 = vlaneseq
      %v887 = vshrl.u32 %v886, 7
      %v888 = vsub.s32 1, %v887
      %v889 = vrot.slane %v855, %v888
      %v890 = vmul.f32 %v880, %v885
      %v891 = vmul.f32 %v880, %v889
      %v892 = vadd.f32 %v873, %v890
      %v893 = vadd.f32 %v874, %v891
      %s894 = scalar_lea.vmem %s1, 88
      %v895 = vld [vmem:[%s894] sm:$0xf]
      %897 = vset.pattern.permute.xlu0 0
      %898 = vperm.xlu0 %897, %v895
      %v899 = vpop.permute.xlu0 %898
      %v901 = vlaneseq
      %v902 = vshrl.u32 %v901, 7
      %v903 = vsub.s32 2, %v902
      %v904 = vrot.slane %v854, %v903
      %v905 = vlaneseq
      %v906 = vshrl.u32 %v905, 7
      %v907 = vsub.s32 2, %v906
      %v908 = vrot.slane %v855, %v907
      %v909 = vmul.f32 %v899, %v904
      %v910 = vmul.f32 %v899, %v908
      %v911 = vadd.f32 %v892, %v909
      %v912 = vadd.f32 %v893, %v910
      %s913 = scalar_lea.vmem %s1, 92
      %v914 = vld [vmem:[%s913] sm:$0xf]
      %916 = vset.pattern.permute.xlu0 0
      %917 = vperm.xlu0 %916, %v914
      %v918 = vpop.permute.xlu0 %917
      %v920 = vlaneseq
      %v921 = vshrl.u32 %v920, 7
      %v922 = vsub.s32 3, %v921
      %v923 = vrot.slane %v854, %v922
      %v924 = vlaneseq
      %v925 = vshrl.u32 %v924, 7
      %v926 = vsub.s32 3, %v925
      %v927 = vrot.slane %v855, %v926
      %v928 = vmul.f32 %v918, %v923
      %v929 = vmul.f32 %v918, %v927
      %v930 = vadd.f32 %v911, %v928
      %v931 = vadd.f32 %v912, %v929
      %932 = vrot.lane.b32.xlu0 %v291, 126
      %v933 = vpop.permute.xlu0 %932
      %934 = vrot.lane.b32.xlu0 %v300, 126
      %v935 = vpop.permute.xlu0 %934
      %vm936 = vcmask 1031168
      %v937 = vsel %vm936, %v933, %v935
      %v940 = vsel %vm936, %v935, 0.0
      %s941 = scalar_lea.vmem %s5, 12
      %v942 = vld [vmem:[%s941] sm:$0x3]
      %v944 = vlaneseq
      %v945 = vshrl.u32 %v944, 7
      %v946 = vsub.s32 0, %v945
      %v947 = vrot.slane %v942, %v946
      %v948 = vlaneseq
      %v949 = vshrl.u32 %v948, 7
      %v950 = vsub.s32 1, %v949
      %v951 = vrot.slane %v942, %v950
      %v954 = vmul.f32 %v937, %v947
      %v955 = vmul.f32 %v940, %v951
      %s956 = scalar_lea.vmem %s1, 96
      %v957 = vld [vmem:[%s956] sm:$0xf]
      %959 = vset.pattern.permute.xlu0 0
      %960 = vperm.xlu0 %959, %v957
      %v961 = vpop.permute.xlu0 %960
      %v963 = vlaneseq
      %v964 = vshrl.u32 %v963, 7
      %v965 = vsub.s32 0, %v964
      %v966 = vrot.slane %v954, %v965
      %v967 = vlaneseq
      %v968 = vshrl.u32 %v967, 7
      %v969 = vsub.s32 0, %v968
      %v970 = vrot.slane %v955, %v969
      %v971 = vmul.f32 %v961, %v966
      %v972 = vmul.f32 %v961, %v970
      %v973 = vadd.f32 %v930, %v971
      %v974 = vadd.f32 %v931, %v972
      %s975 = scalar_lea.vmem %s1, 100
      %v976 = vld [vmem:[%s975] sm:$0xf]
      %978 = vset.pattern.permute.xlu0 0
      %979 = vperm.xlu0 %978, %v976
      %v980 = vpop.permute.xlu0 %979
      %v982 = vlaneseq
      %v983 = vshrl.u32 %v982, 7
      %v984 = vsub.s32 1, %v983
      %v985 = vrot.slane %v954, %v984
      %v986 = vlaneseq
      %v987 = vshrl.u32 %v986, 7
      %v988 = vsub.s32 1, %v987
      %v989 = vrot.slane %v955, %v988
      %v990 = vmul.f32 %v980, %v985
      %v991 = vmul.f32 %v980, %v989
      %v992 = vadd.f32 %v973, %v990
      %v993 = vadd.f32 %v974, %v991
      %s994 = scalar_lea.vmem %s1, 104
      %v995 = vld [vmem:[%s994] sm:$0xf]
      %997 = vset.pattern.permute.xlu0 0
      %998 = vperm.xlu0 %997, %v995
      %v999 = vpop.permute.xlu0 %998
      %v1001 = vlaneseq
      %v1002 = vshrl.u32 %v1001, 7
      %v1003 = vsub.s32 2, %v1002
      %v1004 = vrot.slane %v954, %v1003
      %v1005 = vlaneseq
      %v1006 = vshrl.u32 %v1005, 7
      %v1007 = vsub.s32 2, %v1006
      %v1008 = vrot.slane %v955, %v1007
      %v1009 = vmul.f32 %v999, %v1004
      %v1010 = vmul.f32 %v999, %v1008
      %v1011 = vadd.f32 %v992, %v1009
      %v1012 = vadd.f32 %v993, %v1010
      %s1013 = scalar_lea.vmem %s1, 108
      %v1014 = vld [vmem:[%s1013] sm:$0xf]
      %1016 = vset.pattern.permute.xlu0 0
      %1017 = vperm.xlu0 %1016, %v1014
      %v1018 = vpop.permute.xlu0 %1017
      %v1020 = vlaneseq
      %v1021 = vshrl.u32 %v1020, 7
      %v1022 = vsub.s32 3, %v1021
      %v1023 = vrot.slane %v954, %v1022
      %v1024 = vlaneseq
      %v1025 = vshrl.u32 %v1024, 7
      %v1026 = vsub.s32 3, %v1025
      %v1027 = vrot.slane %v955, %v1026
      %v1028 = vmul.f32 %v1018, %v1023
      %v1029 = vmul.f32 %v1018, %v1027
      %v1030 = vadd.f32 %v1011, %v1028
      %v1031 = vadd.f32 %v1012, %v1029
      %1032 = vrot.lane.b32.xlu0 %v291, 125
      %v1033 = vpop.permute.xlu0 %1032
      %1034 = vrot.lane.b32.xlu0 %v300, 125
      %v1035 = vpop.permute.xlu0 %1034
      %vm1036 = vcmask 1022976
      %v1037 = vsel %vm1036, %v1033, %v1035
      %v1040 = vsel %vm1036, %v1035, 0.0
      %s1041 = scalar_lea.vmem %s5, 14
      %v1042 = vld [vmem:[%s1041] sm:$0x3]
      %v1044 = vlaneseq
      %v1045 = vshrl.u32 %v1044, 7
      %v1046 = vsub.s32 0, %v1045
      %v1047 = vrot.slane %v1042, %v1046
      %v1048 = vlaneseq
      %v1049 = vshrl.u32 %v1048, 7
      %v1050 = vsub.s32 1, %v1049
      %v1051 = vrot.slane %v1042, %v1050
      %v1054 = vmul.f32 %v1037, %v1047
      %v1055 = vmul.f32 %v1040, %v1051
      %s1056 = scalar_lea.vmem %s1, 112
      %v1057 = vld [vmem:[%s1056] sm:$0xf]
      %1059 = vset.pattern.permute.xlu0 0
      %1060 = vperm.xlu0 %1059, %v1057
      %v1061 = vpop.permute.xlu0 %1060
      %v1063 = vlaneseq
      %v1064 = vshrl.u32 %v1063, 7
      %v1065 = vsub.s32 0, %v1064
      %v1066 = vrot.slane %v1054, %v1065
      %v1067 = vlaneseq
      %v1068 = vshrl.u32 %v1067, 7
      %v1069 = vsub.s32 0, %v1068
      %v1070 = vrot.slane %v1055, %v1069
      %v1071 = vmul.f32 %v1061, %v1066
      %v1072 = vmul.f32 %v1061, %v1070
      %v1073 = vadd.f32 %v1030, %v1071
      %v1074 = vadd.f32 %v1031, %v1072
      %s1075 = scalar_lea.vmem %s1, 116
      %v1076 = vld [vmem:[%s1075] sm:$0xf]
      %1078 = vset.pattern.permute.xlu0 0
      %1079 = vperm.xlu0 %1078, %v1076
      %v1080 = vpop.permute.xlu0 %1079
      %v1082 = vlaneseq
      %v1083 = vshrl.u32 %v1082, 7
      %v1084 = vsub.s32 1, %v1083
      %v1085 = vrot.slane %v1054, %v1084
      %v1086 = vlaneseq
      %v1087 = vshrl.u32 %v1086, 7
      %v1088 = vsub.s32 1, %v1087
      %v1089 = vrot.slane %v1055, %v1088
      %v1090 = vmul.f32 %v1080, %v1085
      %v1091 = vmul.f32 %v1080, %v1089
      %v1092 = vadd.f32 %v1073, %v1090
      %v1093 = vadd.f32 %v1074, %v1091
      %s1094 = scalar_lea.vmem %s1, 120
      %v1095 = vld [vmem:[%s1094] sm:$0xf]
      %1097 = vset.pattern.permute.xlu0 0
      %1098 = vperm.xlu0 %1097, %v1095
      %v1099 = vpop.permute.xlu0 %1098
      %v1101 = vlaneseq
      %v1102 = vshrl.u32 %v1101, 7
      %v1103 = vsub.s32 2, %v1102
      %v1104 = vrot.slane %v1054, %v1103
      %v1105 = vlaneseq
      %v1106 = vshrl.u32 %v1105, 7
      %v1107 = vsub.s32 2, %v1106
      %v1108 = vrot.slane %v1055, %v1107
      %v1109 = vmul.f32 %v1099, %v1104
      %v1110 = vmul.f32 %v1099, %v1108
      %v1111 = vadd.f32 %v1092, %v1109
      %v1112 = vadd.f32 %v1093, %v1110
      %s1113 = scalar_lea.vmem %s1, 124
      %v1114 = vld [vmem:[%s1113] sm:$0xf]
      %1116 = vset.pattern.permute.xlu0 0
      %1117 = vperm.xlu0 %1116, %v1114
      %v1118 = vpop.permute.xlu0 %1117
      %v1120 = vlaneseq
      %v1121 = vshrl.u32 %v1120, 7
      %v1122 = vsub.s32 3, %v1121
      %v1123 = vrot.slane %v1054, %v1122
      %v1124 = vlaneseq
      %v1125 = vshrl.u32 %v1124, 7
      %v1126 = vsub.s32 3, %v1125
      %v1127 = vrot.slane %v1055, %v1126
      %v1128 = vmul.f32 %v1118, %v1123
      %v1129 = vmul.f32 %v1118, %v1127
      %v1130 = vadd.f32 %v1111, %v1128
      %v1131 = vadd.f32 %v1112, %v1129
      %1132 = vrot.lane.b32.xlu0 %v291, 124
      %v1133 = vpop.permute.xlu0 %1132
      %1134 = vrot.lane.b32.xlu0 %v300, 124
      %v1135 = vpop.permute.xlu0 %1134
      %vm1136 = vcmask 1014784
      %v1137 = vsel %vm1136, %v1133, %v1135
      %v1140 = vsel %vm1136, %v1135, 0.0
      %s1141 = scalar_lea.vmem %s5, 16
      %v1142 = vld [vmem:[%s1141] sm:$0x3]
      %v1144 = vlaneseq
      %v1145 = vshrl.u32 %v1144, 7
      %v1146 = vsub.s32 0, %v1145
      %v1147 = vrot.slane %v1142, %v1146
      %v1148 = vlaneseq
      %v1149 = vshrl.u32 %v1148, 7
      %v1150 = vsub.s32 1, %v1149
      %v1151 = vrot.slane %v1142, %v1150
      %v1154 = vmul.f32 %v1137, %v1147
      %v1155 = vmul.f32 %v1140, %v1151
      %s1156 = scalar_lea.vmem %s1, 128
      %v1157 = vld [vmem:[%s1156] sm:$0xf]
      %1159 = vset.pattern.permute.xlu0 0
      %1160 = vperm.xlu0 %1159, %v1157
      %v1161 = vpop.permute.xlu0 %1160
      %v1163 = vlaneseq
      %v1164 = vshrl.u32 %v1163, 7
      %v1165 = vsub.s32 0, %v1164
      %v1166 = vrot.slane %v1154, %v1165
      %v1167 = vlaneseq
      %v1168 = vshrl.u32 %v1167, 7
      %v1169 = vsub.s32 0, %v1168
      %v1170 = vrot.slane %v1155, %v1169
      %v1171 = vmul.f32 %v1161, %v1166
      %v1172 = vmul.f32 %v1161, %v1170
      %v1173 = vadd.f32 %v1130, %v1171
      %v1174 = vadd.f32 %v1131, %v1172
      %s1175 = scalar_lea.vmem %s1, 132
      %v1176 = vld [vmem:[%s1175] sm:$0xf]
      %1178 = vset.pattern.permute.xlu0 0
      %1179 = vperm.xlu0 %1178, %v1176
      %v1180 = vpop.permute.xlu0 %1179
      %v1182 = vlaneseq
      %v1183 = vshrl.u32 %v1182, 7
      %v1184 = vsub.s32 1, %v1183
      %v1185 = vrot.slane %v1154, %v1184
      %v1186 = vlaneseq
      %v1187 = vshrl.u32 %v1186, 7
      %v1188 = vsub.s32 1, %v1187
      %v1189 = vrot.slane %v1155, %v1188
      %v1190 = vmul.f32 %v1180, %v1185
      %v1191 = vmul.f32 %v1180, %v1189
      %v1192 = vadd.f32 %v1173, %v1190
      %v1193 = vadd.f32 %v1174, %v1191
      %s1194 = scalar_lea.vmem %s1, 136
      %v1195 = vld [vmem:[%s1194] sm:$0xf]
      %1197 = vset.pattern.permute.xlu0 0
      %1198 = vperm.xlu0 %1197, %v1195
      %v1199 = vpop.permute.xlu0 %1198
      %v1201 = vlaneseq
      %v1202 = vshrl.u32 %v1201, 7
      %v1203 = vsub.s32 2, %v1202
      %v1204 = vrot.slane %v1154, %v1203
      %v1205 = vlaneseq
      %v1206 = vshrl.u32 %v1205, 7
      %v1207 = vsub.s32 2, %v1206
      %v1208 = vrot.slane %v1155, %v1207
      %v1209 = vmul.f32 %v1199, %v1204
      %v1210 = vmul.f32 %v1199, %v1208
      %v1211 = vadd.f32 %v1192, %v1209
      %v1212 = vadd.f32 %v1193, %v1210
      %s1213 = scalar_lea.vmem %s1, 140
      %v1214 = vld [vmem:[%s1213] sm:$0xf]
      %1216 = vset.pattern.permute.xlu0 0
      %1217 = vperm.xlu0 %1216, %v1214
      %v1218 = vpop.permute.xlu0 %1217
      %v1220 = vlaneseq
      %v1221 = vshrl.u32 %v1220, 7
      %v1222 = vsub.s32 3, %v1221
      %v1223 = vrot.slane %v1154, %v1222
      %v1224 = vlaneseq
      %v1225 = vshrl.u32 %v1224, 7
      %v1226 = vsub.s32 3, %v1225
      %v1227 = vrot.slane %v1155, %v1226
      %v1228 = vmul.f32 %v1218, %v1223
      %v1229 = vmul.f32 %v1218, %v1227
      %v1230 = vadd.f32 %v1211, %v1228
      %v1231 = vadd.f32 %v1212, %v1229
      %v1232 = vmax.f32 %v1230, 0.0
      %v1233 = vmax.f32 %v1231, 0.0
      %v1234 = vld [vmem:[%s4] sm:$0xf]
      %1236 = vset.pattern.permute.xlu0 0
      %1237 = vperm.xlu0 %1236, %v1234
      %v1238 = vpop.permute.xlu0 %1237
      %v1240 = vadd.f32 %v1238, 0.0
      %1243 = vrot.lane.b32.xlu0 %v1232, 4
      %v1244 = vpop.permute.xlu0 %1243
      %1245 = vrot.lane.b32.xlu0 %v1233, 4
      %v1246 = vpop.permute.xlu0 %1245
      %v1247 = vsel %vm305, %v1244, %v1246
      %v1250 = vsel %vm305, 0.0, %v1244
      %v1251 = vmul.f32 %v1250, %v315
      %v1252 = vmul.f32 %v1247, %v319
      %v1253 = vld [vmem:[%s3] sm:$0xf]
      %1255 = vset.pattern.permute.xlu0 0
      %1256 = vperm.xlu0 %1255, %v1253
      %v1257 = vpop.permute.xlu0 %1256
      %v1259 = vlaneseq
      %v1260 = vshrl.u32 %v1259, 7
      %v1261 = vsub.s32 0, %v1260
      %v1262 = vrot.slane %v1251, %v1261
      %v1263 = vlaneseq
      %v1264 = vshrl.u32 %v1263, 7
      %v1265 = vsub.s32 0, %v1264
      %v1266 = vrot.slane %v1252, %v1265
      %v1267 = vmul.f32 %v1257, %v1262
      %v1268 = vmul.f32 %v1257, %v1266
      %v1269 = vadd.f32 %v1240, %v1267
      %v1270 = vadd.f32 %v1240, %v1268
      %s1271 = scalar_lea.vmem %s3, 4
      %v1272 = vld [vmem:[%s1271] sm:$0xf]
      %1274 = vset.pattern.permute.xlu0 0
      %1275 = vperm.xlu0 %1274, %v1272
      %v1276 = vpop.permute.xlu0 %1275
      %v1278 = vlaneseq
      %v1279 = vshrl.u32 %v1278, 7
      %v1280 = vsub.s32 1, %v1279
      %v1281 = vrot.slane %v1251, %v1280
      %v1282 = vlaneseq
      %v1283 = vshrl.u32 %v1282, 7
      %v1284 = vsub.s32 1, %v1283
      %v1285 = vrot.slane %v1252, %v1284
      %v1286 = vmul.f32 %v1276, %v1281
      %v1287 = vmul.f32 %v1276, %v1285
      %v1288 = vadd.f32 %v1269, %v1286
      %v1289 = vadd.f32 %v1270, %v1287
      %s1290 = scalar_lea.vmem %s3, 8
      %v1291 = vld [vmem:[%s1290] sm:$0xf]
      %1293 = vset.pattern.permute.xlu0 0
      %1294 = vperm.xlu0 %1293, %v1291
      %v1295 = vpop.permute.xlu0 %1294
      %v1297 = vlaneseq
      %v1298 = vshrl.u32 %v1297, 7
      %v1299 = vsub.s32 2, %v1298
      %v1300 = vrot.slane %v1251, %v1299
      %v1301 = vlaneseq
      %v1302 = vshrl.u32 %v1301, 7
      %v1303 = vsub.s32 2, %v1302
      %v1304 = vrot.slane %v1252, %v1303
      %v1305 = vmul.f32 %v1295, %v1300
      %v1306 = vmul.f32 %v1295, %v1304
      %v1307 = vadd.f32 %v1288, %v1305
      %v1308 = vadd.f32 %v1289, %v1306
      %s1309 = scalar_lea.vmem %s3, 12
      %v1310 = vld [vmem:[%s1309] sm:$0xf]
      %1312 = vset.pattern.permute.xlu0 0
      %1313 = vperm.xlu0 %1312, %v1310
      %v1314 = vpop.permute.xlu0 %1313
      %v1316 = vlaneseq
      %v1317 = vshrl.u32 %v1316, 7
      %v1318 = vsub.s32 3, %v1317
      %v1319 = vrot.slane %v1251, %v1318
      %v1320 = vlaneseq
      %v1321 = vshrl.u32 %v1320, 7
      %v1322 = vsub.s32 3, %v1321
      %v1323 = vrot.slane %v1252, %v1322
      %v1324 = vmul.f32 %v1314, %v1319
      %v1325 = vmul.f32 %v1314, %v1323
      %v1326 = vadd.f32 %v1307, %v1324
      %v1327 = vadd.f32 %v1308, %v1325
      %1328 = vrot.lane.b32.xlu0 %v1232, 3
      %v1329 = vpop.permute.xlu0 %1328
      %1330 = vrot.lane.b32.xlu0 %v1233, 3
      %v1331 = vpop.permute.xlu0 %1330
      %v1332 = vsel %vm403, %v1329, %v1331
      %v1335 = vsel %vm403, 0.0, %v1329
      %v1336 = vmul.f32 %v1335, %v414
      %v1337 = vmul.f32 %v1332, %v418
      %s1338 = scalar_lea.vmem %s3, 16
      %v1339 = vld [vmem:[%s1338] sm:$0xf]
      %1341 = vset.pattern.permute.xlu0 0
      %1342 = vperm.xlu0 %1341, %v1339
      %v1343 = vpop.permute.xlu0 %1342
      %v1345 = vlaneseq
      %v1346 = vshrl.u32 %v1345, 7
      %v1347 = vsub.s32 0, %v1346
      %v1348 = vrot.slane %v1336, %v1347
      %v1349 = vlaneseq
      %v1350 = vshrl.u32 %v1349, 7
      %v1351 = vsub.s32 0, %v1350
      %v1352 = vrot.slane %v1337, %v1351
      %v1353 = vmul.f32 %v1343, %v1348
      %v1354 = vmul.f32 %v1343, %v1352
      %v1355 = vadd.f32 %v1326, %v1353
      %v1356 = vadd.f32 %v1327, %v1354
      %s1357 = scalar_lea.vmem %s3, 20
      %v1358 = vld [vmem:[%s1357] sm:$0xf]
      %1360 = vset.pattern.permute.xlu0 0
      %1361 = vperm.xlu0 %1360, %v1358
      %v1362 = vpop.permute.xlu0 %1361
      %v1364 = vlaneseq
      %v1365 = vshrl.u32 %v1364, 7
      %v1366 = vsub.s32 1, %v1365
      %v1367 = vrot.slane %v1336, %v1366
      %v1368 = vlaneseq
      %v1369 = vshrl.u32 %v1368, 7
      %v1370 = vsub.s32 1, %v1369
      %v1371 = vrot.slane %v1337, %v1370
      %v1372 = vmul.f32 %v1362, %v1367
      %v1373 = vmul.f32 %v1362, %v1371
      %v1374 = vadd.f32 %v1355, %v1372
      %v1375 = vadd.f32 %v1356, %v1373
      %s1376 = scalar_lea.vmem %s3, 24
      %v1377 = vld [vmem:[%s1376] sm:$0xf]
      %1379 = vset.pattern.permute.xlu0 0
      %1380 = vperm.xlu0 %1379, %v1377
      %v1381 = vpop.permute.xlu0 %1380
      %v1383 = vlaneseq
      %v1384 = vshrl.u32 %v1383, 7
      %v1385 = vsub.s32 2, %v1384
      %v1386 = vrot.slane %v1336, %v1385
      %v1387 = vlaneseq
      %v1388 = vshrl.u32 %v1387, 7
      %v1389 = vsub.s32 2, %v1388
      %v1390 = vrot.slane %v1337, %v1389
      %v1391 = vmul.f32 %v1381, %v1386
      %v1392 = vmul.f32 %v1381, %v1390
      %v1393 = vadd.f32 %v1374, %v1391
      %v1394 = vadd.f32 %v1375, %v1392
      %s1395 = scalar_lea.vmem %s3, 28
      %v1396 = vld [vmem:[%s1395] sm:$0xf]
      %1398 = vset.pattern.permute.xlu0 0
      %1399 = vperm.xlu0 %1398, %v1396
      %v1400 = vpop.permute.xlu0 %1399
      %v1402 = vlaneseq
      %v1403 = vshrl.u32 %v1402, 7
      %v1404 = vsub.s32 3, %v1403
      %v1405 = vrot.slane %v1336, %v1404
      %v1406 = vlaneseq
      %v1407 = vshrl.u32 %v1406, 7
      %v1408 = vsub.s32 3, %v1407
      %v1409 = vrot.slane %v1337, %v1408
      %v1410 = vmul.f32 %v1400, %v1405
      %v1411 = vmul.f32 %v1400, %v1409
      %v1412 = vadd.f32 %v1393, %v1410
      %v1413 = vadd.f32 %v1394, %v1411
      %1414 = vrot.lane.b32.xlu0 %v1232, 2
      %v1415 = vpop.permute.xlu0 %1414
      %1416 = vrot.lane.b32.xlu0 %v1233, 2
      %v1417 = vpop.permute.xlu0 %1416
      %v1418 = vsel %vm503, %v1415, %v1417
      %v1421 = vsel %vm503, 0.0, %v1415
      %v1422 = vmul.f32 %v1421, %v514
      %v1423 = vmul.f32 %v1418, %v518
      %s1424 = scalar_lea.vmem %s3, 32
      %v1425 = vld [vmem:[%s1424] sm:$0xf]
      %1427 = vset.pattern.permute.xlu0 0
      %1428 = vperm.xlu0 %1427, %v1425
      %v1429 = vpop.permute.xlu0 %1428
      %v1431 = vlaneseq
      %v1432 = vshrl.u32 %v1431, 7
      %v1433 = vsub.s32 0, %v1432
      %v1434 = vrot.slane %v1422, %v1433
      %v1435 = vlaneseq
      %v1436 = vshrl.u32 %v1435, 7
      %v1437 = vsub.s32 0, %v1436
      %v1438 = vrot.slane %v1423, %v1437
      %v1439 = vmul.f32 %v1429, %v1434
      %v1440 = vmul.f32 %v1429, %v1438
      %v1441 = vadd.f32 %v1412, %v1439
      %v1442 = vadd.f32 %v1413, %v1440
      %s1443 = scalar_lea.vmem %s3, 36
      %v1444 = vld [vmem:[%s1443] sm:$0xf]
      %1446 = vset.pattern.permute.xlu0 0
      %1447 = vperm.xlu0 %1446, %v1444
      %v1448 = vpop.permute.xlu0 %1447
      %v1450 = vlaneseq
      %v1451 = vshrl.u32 %v1450, 7
      %v1452 = vsub.s32 1, %v1451
      %v1453 = vrot.slane %v1422, %v1452
      %v1454 = vlaneseq
      %v1455 = vshrl.u32 %v1454, 7
      %v1456 = vsub.s32 1, %v1455
      %v1457 = vrot.slane %v1423, %v1456
      %v1458 = vmul.f32 %v1448, %v1453
      %v1459 = vmul.f32 %v1448, %v1457
      %v1460 = vadd.f32 %v1441, %v1458
      %v1461 = vadd.f32 %v1442, %v1459
      %s1462 = scalar_lea.vmem %s3, 40
      %v1463 = vld [vmem:[%s1462] sm:$0xf]
      %1465 = vset.pattern.permute.xlu0 0
      %1466 = vperm.xlu0 %1465, %v1463
      %v1467 = vpop.permute.xlu0 %1466
      %v1469 = vlaneseq
      %v1470 = vshrl.u32 %v1469, 7
      %v1471 = vsub.s32 2, %v1470
      %v1472 = vrot.slane %v1422, %v1471
      %v1473 = vlaneseq
      %v1474 = vshrl.u32 %v1473, 7
      %v1475 = vsub.s32 2, %v1474
      %v1476 = vrot.slane %v1423, %v1475
      %v1477 = vmul.f32 %v1467, %v1472
      %v1478 = vmul.f32 %v1467, %v1476
      %v1479 = vadd.f32 %v1460, %v1477
      %v1480 = vadd.f32 %v1461, %v1478
      %s1481 = scalar_lea.vmem %s3, 44
      %v1482 = vld [vmem:[%s1481] sm:$0xf]
      %1484 = vset.pattern.permute.xlu0 0
      %1485 = vperm.xlu0 %1484, %v1482
      %v1486 = vpop.permute.xlu0 %1485
      %v1488 = vlaneseq
      %v1489 = vshrl.u32 %v1488, 7
      %v1490 = vsub.s32 3, %v1489
      %v1491 = vrot.slane %v1422, %v1490
      %v1492 = vlaneseq
      %v1493 = vshrl.u32 %v1492, 7
      %v1494 = vsub.s32 3, %v1493
      %v1495 = vrot.slane %v1423, %v1494
      %v1496 = vmul.f32 %v1486, %v1491
      %v1497 = vmul.f32 %v1486, %v1495
      %v1498 = vadd.f32 %v1479, %v1496
      %v1499 = vadd.f32 %v1480, %v1497
      %1500 = vrot.lane.b32.xlu0 %v1232, 1
      %v1501 = vpop.permute.xlu0 %1500
      %1502 = vrot.lane.b32.xlu0 %v1233, 1
      %v1503 = vpop.permute.xlu0 %1502
      %v1504 = vsel %vm603, %v1501, %v1503
      %v1507 = vsel %vm603, 0.0, %v1501
      %v1508 = vmul.f32 %v1507, %v614
      %v1509 = vmul.f32 %v1504, %v618
      %s1510 = scalar_lea.vmem %s3, 48
      %v1511 = vld [vmem:[%s1510] sm:$0xf]
      %1513 = vset.pattern.permute.xlu0 0
      %1514 = vperm.xlu0 %1513, %v1511
      %v1515 = vpop.permute.xlu0 %1514
      %v1517 = vlaneseq
      %v1518 = vshrl.u32 %v1517, 7
      %v1519 = vsub.s32 0, %v1518
      %v1520 = vrot.slane %v1508, %v1519
      %v1521 = vlaneseq
      %v1522 = vshrl.u32 %v1521, 7
      %v1523 = vsub.s32 0, %v1522
      %v1524 = vrot.slane %v1509, %v1523
      %v1525 = vmul.f32 %v1515, %v1520
      %v1526 = vmul.f32 %v1515, %v1524
      %v1527 = vadd.f32 %v1498, %v1525
      %v1528 = vadd.f32 %v1499, %v1526
      %s1529 = scalar_lea.vmem %s3, 52
      %v1530 = vld [vmem:[%s1529] sm:$0xf]
      %1532 = vset.pattern.permute.xlu0 0
      %1533 = vperm.xlu0 %1532, %v1530
      %v1534 = vpop.permute.xlu0 %1533
      %v1536 = vlaneseq
      %v1537 = vshrl.u32 %v1536, 7
      %v1538 = vsub.s32 1, %v1537
      %v1539 = vrot.slane %v1508, %v1538
      %v1540 = vlaneseq
      %v1541 = vshrl.u32 %v1540, 7
      %v1542 = vsub.s32 1, %v1541
      %v1543 = vrot.slane %v1509, %v1542
      %v1544 = vmul.f32 %v1534, %v1539
      %v1545 = vmul.f32 %v1534, %v1543
      %v1546 = vadd.f32 %v1527, %v1544
      %v1547 = vadd.f32 %v1528, %v1545
      %s1548 = scalar_lea.vmem %s3, 56
      %v1549 = vld [vmem:[%s1548] sm:$0xf]
      %1551 = vset.pattern.permute.xlu0 0
      %1552 = vperm.xlu0 %1551, %v1549
      %v1553 = vpop.permute.xlu0 %1552
      %v1555 = vlaneseq
      %v1556 = vshrl.u32 %v1555, 7
      %v1557 = vsub.s32 2, %v1556
      %v1558 = vrot.slane %v1508, %v1557
      %v1559 = vlaneseq
      %v1560 = vshrl.u32 %v1559, 7
      %v1561 = vsub.s32 2, %v1560
      %v1562 = vrot.slane %v1509, %v1561
      %v1563 = vmul.f32 %v1553, %v1558
      %v1564 = vmul.f32 %v1553, %v1562
      %v1565 = vadd.f32 %v1546, %v1563
      %v1566 = vadd.f32 %v1547, %v1564
      %s1567 = scalar_lea.vmem %s3, 60
      %v1568 = vld [vmem:[%s1567] sm:$0xf]
      %1570 = vset.pattern.permute.xlu0 0
      %1571 = vperm.xlu0 %1570, %v1568
      %v1572 = vpop.permute.xlu0 %1571
      %v1574 = vlaneseq
      %v1575 = vshrl.u32 %v1574, 7
      %v1576 = vsub.s32 3, %v1575
      %v1577 = vrot.slane %v1508, %v1576
      %v1578 = vlaneseq
      %v1579 = vshrl.u32 %v1578, 7
      %v1580 = vsub.s32 3, %v1579
      %v1581 = vrot.slane %v1509, %v1580
      %v1582 = vmul.f32 %v1572, %v1577
      %v1583 = vmul.f32 %v1572, %v1581
      %v1584 = vadd.f32 %v1565, %v1582
      %v1585 = vadd.f32 %v1566, %v1583
      %v1586 = vmul.f32 %v1232, %v705
      %v1587 = vmul.f32 %v1233, %v709
      %s1588 = scalar_lea.vmem %s3, 64
      %v1589 = vld [vmem:[%s1588] sm:$0xf]
      %1591 = vset.pattern.permute.xlu0 0
      %1592 = vperm.xlu0 %1591, %v1589
      %v1593 = vpop.permute.xlu0 %1592
      %v1595 = vlaneseq
      %v1596 = vshrl.u32 %v1595, 7
      %v1597 = vsub.s32 0, %v1596
      %v1598 = vrot.slane %v1586, %v1597
      %v1599 = vlaneseq
      %v1600 = vshrl.u32 %v1599, 7
      %v1601 = vsub.s32 0, %v1600
      %v1602 = vrot.slane %v1587, %v1601
      %v1603 = vmul.f32 %v1593, %v1598
      %v1604 = vmul.f32 %v1593, %v1602
      %v1605 = vadd.f32 %v1584, %v1603
      %v1606 = vadd.f32 %v1585, %v1604
      %s1607 = scalar_lea.vmem %s3, 68
      %v1608 = vld [vmem:[%s1607] sm:$0xf]
      %1610 = vset.pattern.permute.xlu0 0
      %1611 = vperm.xlu0 %1610, %v1608
      %v1612 = vpop.permute.xlu0 %1611
      %v1614 = vlaneseq
      %v1615 = vshrl.u32 %v1614, 7
      %v1616 = vsub.s32 1, %v1615
      %v1617 = vrot.slane %v1586, %v1616
      %v1618 = vlaneseq
      %v1619 = vshrl.u32 %v1618, 7
      %v1620 = vsub.s32 1, %v1619
      %v1621 = vrot.slane %v1587, %v1620
      %v1622 = vmul.f32 %v1612, %v1617
      %v1623 = vmul.f32 %v1612, %v1621
      %v1624 = vadd.f32 %v1605, %v1622
      %v1625 = vadd.f32 %v1606, %v1623
      %s1626 = scalar_lea.vmem %s3, 72
      %v1627 = vld [vmem:[%s1626] sm:$0xf]
      %1629 = vset.pattern.permute.xlu0 0
      %1630 = vperm.xlu0 %1629, %v1627
      %v1631 = vpop.permute.xlu0 %1630
      %v1633 = vlaneseq
      %v1634 = vshrl.u32 %v1633, 7
      %v1635 = vsub.s32 2, %v1634
      %v1636 = vrot.slane %v1586, %v1635
      %v1637 = vlaneseq
      %v1638 = vshrl.u32 %v1637, 7
      %v1639 = vsub.s32 2, %v1638
      %v1640 = vrot.slane %v1587, %v1639
      %v1641 = vmul.f32 %v1631, %v1636
      %v1642 = vmul.f32 %v1631, %v1640
      %v1643 = vadd.f32 %v1624, %v1641
      %v1644 = vadd.f32 %v1625, %v1642
      %s1645 = scalar_lea.vmem %s3, 76
      %v1646 = vld [vmem:[%s1645] sm:$0xf]
      %1648 = vset.pattern.permute.xlu0 0
      %1649 = vperm.xlu0 %1648, %v1646
      %v1650 = vpop.permute.xlu0 %1649
      %v1652 = vlaneseq
      %v1653 = vshrl.u32 %v1652, 7
      %v1654 = vsub.s32 3, %v1653
      %v1655 = vrot.slane %v1586, %v1654
      %v1656 = vlaneseq
      %v1657 = vshrl.u32 %v1656, 7
      %v1658 = vsub.s32 3, %v1657
      %v1659 = vrot.slane %v1587, %v1658
      %v1660 = vmul.f32 %v1650, %v1655
      %v1661 = vmul.f32 %v1650, %v1659
      %v1662 = vadd.f32 %v1643, %v1660
      %v1663 = vadd.f32 %v1644, %v1661
      %1664 = vrot.lane.b32.xlu0 %v1232, 127
      %v1665 = vpop.permute.xlu0 %1664
      %1666 = vrot.lane.b32.xlu0 %v1233, 127
      %v1667 = vpop.permute.xlu0 %1666
      %v1668 = vsel %vm836, %v1665, %v1667
      %v1671 = vsel %vm836, %v1667, 0.0
      %v1672 = vmul.f32 %v1668, %v847
      %v1673 = vmul.f32 %v1671, %v851
      %s1674 = scalar_lea.vmem %s3, 80
      %v1675 = vld [vmem:[%s1674] sm:$0xf]
      %1677 = vset.pattern.permute.xlu0 0
      %1678 = vperm.xlu0 %1677, %v1675
      %v1679 = vpop.permute.xlu0 %1678
      %v1681 = vlaneseq
      %v1682 = vshrl.u32 %v1681, 7
      %v1683 = vsub.s32 0, %v1682
      %v1684 = vrot.slane %v1672, %v1683
      %v1685 = vlaneseq
      %v1686 = vshrl.u32 %v1685, 7
      %v1687 = vsub.s32 0, %v1686
      %v1688 = vrot.slane %v1673, %v1687
      %v1689 = vmul.f32 %v1679, %v1684
      %v1690 = vmul.f32 %v1679, %v1688
      %v1691 = vadd.f32 %v1662, %v1689
      %v1692 = vadd.f32 %v1663, %v1690
      %s1693 = scalar_lea.vmem %s3, 84
      %v1694 = vld [vmem:[%s1693] sm:$0xf]
      %1696 = vset.pattern.permute.xlu0 0
      %1697 = vperm.xlu0 %1696, %v1694
      %v1698 = vpop.permute.xlu0 %1697
      %v1700 = vlaneseq
      %v1701 = vshrl.u32 %v1700, 7
      %v1702 = vsub.s32 1, %v1701
      %v1703 = vrot.slane %v1672, %v1702
      %v1704 = vlaneseq
      %v1705 = vshrl.u32 %v1704, 7
      %v1706 = vsub.s32 1, %v1705
      %v1707 = vrot.slane %v1673, %v1706
      %v1708 = vmul.f32 %v1698, %v1703
      %v1709 = vmul.f32 %v1698, %v1707
      %v1710 = vadd.f32 %v1691, %v1708
      %v1711 = vadd.f32 %v1692, %v1709
      %s1712 = scalar_lea.vmem %s3, 88
      %v1713 = vld [vmem:[%s1712] sm:$0xf]
      %1715 = vset.pattern.permute.xlu0 0
      %1716 = vperm.xlu0 %1715, %v1713
      %v1717 = vpop.permute.xlu0 %1716
      %v1719 = vlaneseq
      %v1720 = vshrl.u32 %v1719, 7
      %v1721 = vsub.s32 2, %v1720
      %v1722 = vrot.slane %v1672, %v1721
      %v1723 = vlaneseq
      %v1724 = vshrl.u32 %v1723, 7
      %v1725 = vsub.s32 2, %v1724
      %v1726 = vrot.slane %v1673, %v1725
      %v1727 = vmul.f32 %v1717, %v1722
      %v1728 = vmul.f32 %v1717, %v1726
      %v1729 = vadd.f32 %v1710, %v1727
      %v1730 = vadd.f32 %v1711, %v1728
      %s1731 = scalar_lea.vmem %s3, 92
      %v1732 = vld [vmem:[%s1731] sm:$0xf]
      %1734 = vset.pattern.permute.xlu0 0
      %1735 = vperm.xlu0 %1734, %v1732
      %v1736 = vpop.permute.xlu0 %1735
      %v1738 = vlaneseq
      %v1739 = vshrl.u32 %v1738, 7
      %v1740 = vsub.s32 3, %v1739
      %v1741 = vrot.slane %v1672, %v1740
      %v1742 = vlaneseq
      %v1743 = vshrl.u32 %v1742, 7
      %v1744 = vsub.s32 3, %v1743
      %v1745 = vrot.slane %v1673, %v1744
      %v1746 = vmul.f32 %v1736, %v1741
      %v1747 = vmul.f32 %v1736, %v1745
      %v1748 = vadd.f32 %v1729, %v1746
      %v1749 = vadd.f32 %v1730, %v1747
      %1750 = vrot.lane.b32.xlu0 %v1232, 126
      %v1751 = vpop.permute.xlu0 %1750
      %1752 = vrot.lane.b32.xlu0 %v1233, 126
      %v1753 = vpop.permute.xlu0 %1752
      %v1754 = vsel %vm936, %v1751, %v1753
      %v1757 = vsel %vm936, %v1753, 0.0
      %v1758 = vmul.f32 %v1754, %v947
      %v1759 = vmul.f32 %v1757, %v951
      %s1760 = scalar_lea.vmem %s3, 96
      %v1761 = vld [vmem:[%s1760] sm:$0xf]
      %1763 = vset.pattern.permute.xlu0 0
      %1764 = vperm.xlu0 %1763, %v1761
      %v1765 = vpop.permute.xlu0 %1764
      %v1767 = vlaneseq
      %v1768 = vshrl.u32 %v1767, 7
      %v1769 = vsub.s32 0, %v1768
      %v1770 = vrot.slane %v1758, %v1769
      %v1771 = vlaneseq
      %v1772 = vshrl.u32 %v1771, 7
      %v1773 = vsub.s32 0, %v1772
      %v1774 = vrot.slane %v1759, %v1773
      %v1775 = vmul.f32 %v1765, %v1770
      %v1776 = vmul.f32 %v1765, %v1774
      %v1777 = vadd.f32 %v1748, %v1775
      %v1778 = vadd.f32 %v1749, %v1776
      %s1779 = scalar_lea.vmem %s3, 100
      %v1780 = vld [vmem:[%s1779] sm:$0xf]
      %1782 = vset.pattern.permute.xlu0 0
      %1783 = vperm.xlu0 %1782, %v1780
      %v1784 = vpop.permute.xlu0 %1783
      %v1786 = vlaneseq
      %v1787 = vshrl.u32 %v1786, 7
      %v1788 = vsub.s32 1, %v1787
      %v1789 = vrot.slane %v1758, %v1788
      %v1790 = vlaneseq
      %v1791 = vshrl.u32 %v1790, 7
      %v1792 = vsub.s32 1, %v1791
      %v1793 = vrot.slane %v1759, %v1792
      %v1794 = vmul.f32 %v1784, %v1789
      %v1795 = vmul.f32 %v1784, %v1793
      %v1796 = vadd.f32 %v1777, %v1794
      %v1797 = vadd.f32 %v1778, %v1795
      %s1798 = scalar_lea.vmem %s3, 104
      %v1799 = vld [vmem:[%s1798] sm:$0xf]
      %1801 = vset.pattern.permute.xlu0 0
      %1802 = vperm.xlu0 %1801, %v1799
      %v1803 = vpop.permute.xlu0 %1802
      %v1805 = vlaneseq
      %v1806 = vshrl.u32 %v1805, 7
      %v1807 = vsub.s32 2, %v1806
      %v1808 = vrot.slane %v1758, %v1807
      %v1809 = vlaneseq
      %v1810 = vshrl.u32 %v1809, 7
      %v1811 = vsub.s32 2, %v1810
      %v1812 = vrot.slane %v1759, %v1811
      %v1813 = vmul.f32 %v1803, %v1808
      %v1814 = vmul.f32 %v1803, %v1812
      %v1815 = vadd.f32 %v1796, %v1813
      %v1816 = vadd.f32 %v1797, %v1814
      %s1817 = scalar_lea.vmem %s3, 108
      %v1818 = vld [vmem:[%s1817] sm:$0xf]
      %1820 = vset.pattern.permute.xlu0 0
      %1821 = vperm.xlu0 %1820, %v1818
      %v1822 = vpop.permute.xlu0 %1821
      %v1824 = vlaneseq
      %v1825 = vshrl.u32 %v1824, 7
      %v1826 = vsub.s32 3, %v1825
      %v1827 = vrot.slane %v1758, %v1826
      %v1828 = vlaneseq
      %v1829 = vshrl.u32 %v1828, 7
      %v1830 = vsub.s32 3, %v1829
      %v1831 = vrot.slane %v1759, %v1830
      %v1832 = vmul.f32 %v1822, %v1827
      %v1833 = vmul.f32 %v1822, %v1831
      %v1834 = vadd.f32 %v1815, %v1832
      %v1835 = vadd.f32 %v1816, %v1833
      %1836 = vrot.lane.b32.xlu0 %v1232, 125
      %v1837 = vpop.permute.xlu0 %1836
      %1838 = vrot.lane.b32.xlu0 %v1233, 125
      %v1839 = vpop.permute.xlu0 %1838
      %v1840 = vsel %vm1036, %v1837, %v1839
      %v1843 = vsel %vm1036, %v1839, 0.0
      %v1844 = vmul.f32 %v1840, %v1047
      %v1845 = vmul.f32 %v1843, %v1051
      %s1846 = scalar_lea.vmem %s3, 112
      %v1847 = vld [vmem:[%s1846] sm:$0xf]
      %1849 = vset.pattern.permute.xlu0 0
      %1850 = vperm.xlu0 %1849, %v1847
      %v1851 = vpop.permute.xlu0 %1850
      %v1853 = vlaneseq
      %v1854 = vshrl.u32 %v1853, 7
      %v1855 = vsub.s32 0, %v1854
      %v1856 = vrot.slane %v1844, %v1855
      %v1857 = vlaneseq
      %v1858 = vshrl.u32 %v1857, 7
      %v1859 = vsub.s32 0, %v1858
      %v1860 = vrot.slane %v1845, %v1859
      %v1861 = vmul.f32 %v1851, %v1856
      %v1862 = vmul.f32 %v1851, %v1860
      %v1863 = vadd.f32 %v1834, %v1861
      %v1864 = vadd.f32 %v1835, %v1862
      %s1865 = scalar_lea.vmem %s3, 116
      %v1866 = vld [vmem:[%s1865] sm:$0xf]
      %1868 = vset.pattern.permute.xlu0 0
      %1869 = vperm.xlu0 %1868, %v1866
      %v1870 = vpop.permute.xlu0 %1869
      %v1872 = vlaneseq
      %v1873 = vshrl.u32 %v1872, 7
      %v1874 = vsub.s32 1, %v1873
      %v1875 = vrot.slane %v1844, %v1874
      %v1876 = vlaneseq
      %v1877 = vshrl.u32 %v1876, 7
      %v1878 = vsub.s32 1, %v1877
      %v1879 = vrot.slane %v1845, %v1878
      %v1880 = vmul.f32 %v1870, %v1875
      %v1881 = vmul.f32 %v1870, %v1879
      %v1882 = vadd.f32 %v1863, %v1880
      %v1883 = vadd.f32 %v1864, %v1881
      %s1884 = scalar_lea.vmem %s3, 120
      %v1885 = vld [vmem:[%s1884] sm:$0xf]
      %1887 = vset.pattern.permute.xlu0 0
      %1888 = vperm.xlu0 %1887, %v1885
      %v1889 = vpop.permute.xlu0 %1888
      %v1891 = vlaneseq
      %v1892 = vshrl.u32 %v1891, 7
      %v1893 = vsub.s32 2, %v1892
      %v1894 = vrot.slane %v1844, %v1893
      %v1895 = vlaneseq
      %v1896 = vshrl.u32 %v1895, 7
      %v1897 = vsub.s32 2, %v1896
      %v1898 = vrot.slane %v1845, %v1897
      %v1899 = vmul.f32 %v1889, %v1894
      %v1900 = vmul.f32 %v1889, %v1898
      %v1901 = vadd.f32 %v1882, %v1899
      %v1902 = vadd.f32 %v1883, %v1900
      %s1903 = scalar_lea.vmem %s3, 124
      %v1904 = vld [vmem:[%s1903] sm:$0xf]
      %1906 = vset.pattern.permute.xlu0 0
      %1907 = vperm.xlu0 %1906, %v1904
      %v1908 = vpop.permute.xlu0 %1907
      %v1910 = vlaneseq
      %v1911 = vshrl.u32 %v1910, 7
      %v1912 = vsub.s32 3, %v1911
      %v1913 = vrot.slane %v1844, %v1912
      %v1914 = vlaneseq
      %v1915 = vshrl.u32 %v1914, 7
      %v1916 = vsub.s32 3, %v1915
      %v1917 = vrot.slane %v1845, %v1916
      %v1918 = vmul.f32 %v1908, %v1913
      %v1919 = vmul.f32 %v1908, %v1917
      %v1920 = vadd.f32 %v1901, %v1918
      %v1921 = vadd.f32 %v1902, %v1919
      %1922 = vrot.lane.b32.xlu0 %v1232, 124
      %v1923 = vpop.permute.xlu0 %1922
      %1924 = vrot.lane.b32.xlu0 %v1233, 124
      %v1925 = vpop.permute.xlu0 %1924
      %v1926 = vsel %vm1136, %v1923, %v1925
      %v1929 = vsel %vm1136, %v1925, 0.0
      %v1930 = vmul.f32 %v1926, %v1147
      %v1931 = vmul.f32 %v1929, %v1151
      %s1932 = scalar_lea.vmem %s3, 128
      %v1933 = vld [vmem:[%s1932] sm:$0xf]
      %1935 = vset.pattern.permute.xlu0 0
      %1936 = vperm.xlu0 %1935, %v1933
      %v1937 = vpop.permute.xlu0 %1936
      %v1939 = vlaneseq
      %v1940 = vshrl.u32 %v1939, 7
      %v1941 = vsub.s32 0, %v1940
      %v1942 = vrot.slane %v1930, %v1941
      %v1943 = vlaneseq
      %v1944 = vshrl.u32 %v1943, 7
      %v1945 = vsub.s32 0, %v1944
      %v1946 = vrot.slane %v1931, %v1945
      %v1947 = vmul.f32 %v1937, %v1942
      %v1948 = vmul.f32 %v1937, %v1946
      %v1949 = vadd.f32 %v1920, %v1947
      %v1950 = vadd.f32 %v1921, %v1948
      %s1951 = scalar_lea.vmem %s3, 132
      %v1952 = vld [vmem:[%s1951] sm:$0xf]
      %1954 = vset.pattern.permute.xlu0 0
      %1955 = vperm.xlu0 %1954, %v1952
      %v1956 = vpop.permute.xlu0 %1955
      %v1958 = vlaneseq
      %v1959 = vshrl.u32 %v1958, 7
      %v1960 = vsub.s32 1, %v1959
      %v1961 = vrot.slane %v1930, %v1960
      %v1962 = vlaneseq
      %v1963 = vshrl.u32 %v1962, 7
      %v1964 = vsub.s32 1, %v1963
      %v1965 = vrot.slane %v1931, %v1964
      %v1966 = vmul.f32 %v1956, %v1961
      %v1967 = vmul.f32 %v1956, %v1965
      %v1968 = vadd.f32 %v1949, %v1966
      %v1969 = vadd.f32 %v1950, %v1967
      %s1970 = scalar_lea.vmem %s3, 136
      %v1971 = vld [vmem:[%s1970] sm:$0xf]
      %1973 = vset.pattern.permute.xlu0 0
      %1974 = vperm.xlu0 %1973, %v1971
      %v1975 = vpop.permute.xlu0 %1974
      %v1977 = vlaneseq
      %v1978 = vshrl.u32 %v1977, 7
      %v1979 = vsub.s32 2, %v1978
      %v1980 = vrot.slane %v1930, %v1979
      %v1981 = vlaneseq
      %v1982 = vshrl.u32 %v1981, 7
      %v1983 = vsub.s32 2, %v1982
      %v1984 = vrot.slane %v1931, %v1983
      %v1985 = vmul.f32 %v1975, %v1980
      %v1986 = vmul.f32 %v1975, %v1984
      %v1987 = vadd.f32 %v1968, %v1985
      %v1988 = vadd.f32 %v1969, %v1986
      %s1989 = scalar_lea.vmem %s3, 140
      %v1990 = vld [vmem:[%s1989] sm:$0xf]
      %1992 = vset.pattern.permute.xlu0 0
      %1993 = vperm.xlu0 %1992, %v1990
      %v1994 = vpop.permute.xlu0 %1993
      %v1996 = vlaneseq
      %v1997 = vshrl.u32 %v1996, 7
      %v1998 = vsub.s32 3, %v1997
      %v1999 = vrot.slane %v1930, %v1998
      %v2000 = vlaneseq
      %v2001 = vshrl.u32 %v2000, 7
      %v2002 = vsub.s32 3, %v2001
      %v2003 = vrot.slane %v1931, %v2002
      %v2004 = vmul.f32 %v1994, %v1999
      %v2005 = vmul.f32 %v1994, %v2003
      %v2006 = vadd.f32 %v1987, %v2004
      %v2007 = vadd.f32 %v1988, %v2005
      %v2009 = vadd.f32 %v2006, %v291
      %v2010 = vadd.f32 %v2007, %v300
      %v2011 = vmax.f32 %v2009, 0.0
      %v2012 = vmax.f32 %v2010, 0.0
      %v2015 = vcombine.low %v2011, %v2012
      %2017 = vst [vmem:[%s289] sm:$0xff] %v2015
      %s2018 = smul.u32 2, %s22
      %p2019 = scmp.lt.s32.totalorder %s21, 1
      %s2020 = scalar_select %p2019, %s21, 1
      %p2021 = scmp.lt.s32.totalorder %s2018, 1
      %s2022 = scalar_select %p2021, %s2018, 1
      %s2023 = smul.addr %s2020, 2
      %s2024 = sadd.s32 %s2022, %s2023
      %s2025 = smul.addr %s2024, 4
      %s2026 = scalar_lea.vmem %s6, %s2025
      // Predicated region
      $region45: #{speech_basic_block.1} parent=43 // pred_check
        %p2027 = pneg %p182
      $region46: #{speech_basic_block.1} parent=43 // pred_check_branch
        %2029 = sbr.rel (%p2027) target = $region48
      $region47: #{speech_basic_block.1} parent=43 // pred_region
        %s2030 = smul.u32 2, %s22
      $region48: #{speech_basic_block.1} parent=43 // pred_fallthru
        _
    $region44: #{speech_basic_block.1} parent=5 // pred_fallthru
      _
    %p2031 = scmp.le.s32.totalorder 2, %s12
    // Predicated region
    $region49: #{speech_basic_block.1} parent=5 // pred_check
      %p2032 = pneg %p2031
    $region50: #{speech_basic_block.1} parent=5 // pred_check_branch
      %2034 = sbr.rel (%p2032) target = $region52
    $region51: #{speech_basic_block.1} parent=5 // pred_region
      %s2035 = ssub.s32 %s12, 2
      // Predicated region
      $region53: #{speech_basic_block.1} parent=51 // pred_check
        %p2036 = pneg %p188
      $region54: #{speech_basic_block.1} parent=51 // pred_check_branch
        %2038 = sbr.rel (%p2036) target = $region56
      $region55: #{speech_basic_block.1} parent=51 // pred_region
        %s2039 = smul.u32 2, %s24
        %p2040 = scmp.lt.s32.totalorder %s23, 1
        %s2041 = scalar_select %p2040, %s23, 1
        %p2042 = scmp.lt.s32.totalorder %s2039, 1
        %s2043 = scalar_select %p2042, %s2039, 1
        %s2044 = smul.addr %s2041, 2
        %s2045 = sadd.s32 %s2043, %s2044
        %s2046 = smul.addr %s2045, 4
        %s2047 = scalar_lea.vmem %s6, %s2046
      $region56: #{speech_basic_block.1} parent=51 // pred_fallthru
        _
    $region52: #{speech_basic_block.1} parent=5 // pred_fallthru
      _
  $region6: #{speech_basic_block.1} parent=0 // loop_footer
    %s16 = sadd.s32 1, %s12
  $region7: #{speech_basic_block.1} parent=0 // loop_footer_branch
    %11 = sbr.rel target = $region3
  $region8: #{speech_basic_block.1} parent=0 // loop_exit
    _

</llo_original>
